<compile_context>
chip_gen: v7x
topology: tpu7x:2x2x1
jax: 0.10.0
libtpu: 0.0.40
codegen_flags: <defaults>
</compile_context>

<pallas_src>
import functools

import jax
import jax.numpy as jnp
from jax.experimental import pallas as pl
from jax.experimental.pallas import tpu as pltpu

BP = 8     # padded batch (sublane alignment of per-step row offsets)
VP = 128   # padded vocab (lane-aligned one-hot)
CP = 128   # padded logit lanes (lane-dense output store)


# ----------------------------------------------------------------------------
# Fused kernel: one-hot @ LUT (gate inputs, both dirs, time-aligned, bias in)
# -> fused fwd/bwd LSTM recurrence -> running max-pool -> MLP head.
# ----------------------------------------------------------------------------
def _bilstm_fused_kernel(idx_ref, lut_ref, wts_ref, out_ref, *, T, Bp, H, Vp, Cp):
    TB = T * Bp
    V2 = 2 * Vp
    H2 = 2 * H
    H6 = 6 * H

    # ---- ALL gate inputs in one matmul --------------------------------------
    # lut rows [0:Vp]  -> fwd-direction gate columns (token at step t)
    # lut rows [Vp:2Vp]-> bwd-direction gate columns (token at step T-1-t,
    #                     supplied via idx col 1), biases baked in,
    # columns pre-permuted to [i_f,i_b,f_f,f_b,o_f,o_b,g_f,g_b].
    iota_v = jax.lax.broadcasted_iota(jnp.int32, (TB, Vp), 1)
    onehot = jnp.concatenate(
        [(iota_v == idx_ref[:, 0:1]), (iota_v == idx_ref[:, 1:2])],
        axis=1).astype(jnp.float32)                                  # (TB, 2Vp)
    gxa = jnp.dot(onehot, lut_ref[0:V2, :],
                  preferred_element_type=jnp.float32)                # (TB, 8H)

    # ---- packed initial state / head biases (row-sliced loads, then value
    #      slicing; every ref slice start is sublane aligned) ----------------
    state = lut_ref[V2:V2 + 2 * Bp, :]                               # (2Bp, 8H)
    h = state[0:Bp, 0:H2]                                            # [h_f|h_b]
    c = state[Bp:2 * Bp, 0:H2]                                       # [c_f|c_b]
    bias_rows = lut_ref[V2 + 2 * Bp:V2 + 2 * Bp + 2, :]
    b1 = bias_rows[0:1, 0:H]
    b2 = bias_rows[1:2, 0:Cp]

    whh = wts_ref[0:H2, :]                      # (2H, 8H) bf16, block-struct.
    head = wts_ref[H2:, :]                      # (3H, 8H) bf16
    w1 = head[0:H2, 0:H]                        # (2H, H)
    w2 = head[H2:H2 + H, 0:Cp]                  # (H, Cp)

    # ---- fused fwd/bwd recurrence, fully unrolled (T tiny & static) --------
    pooled = None
    for t in range(T):
        gates = gxa[t * Bp:(t + 1) * Bp, :] + jnp.dot(
            h.astype(jnp.bfloat16), whh, preferred_element_type=jnp.float32)
        sig = jax.nn.sigmoid(gates[:, :H6])     # [ i | f | o ], both dirs
        g = jnp.tanh(gates[:, H6:])             # [ g_f | g_b ]
        c = sig[:, H2:2 * H2] * c + sig[:, 0:H2] * g
        h = sig[:, 2 * H2:H6] * jnp.tanh(c)     # stays in [fwd | bwd] layout
        pooled = h if t == 0 else jnp.maximum(pooled, h)

    # ---- head: tanh -> Linear(2H->H) -> tanh -> Linear(H->C) ---------------
    y = jnp.dot(jnp.tanh(pooled).astype(jnp.bfloat16), w1,
                preferred_element_type=jnp.float32) + b1
    y = jnp.dot(jnp.tanh(y).astype(jnp.bfloat16), w2,
                preferred_element_type=jnp.float32) + b2
    out_ref[...] = y                            # (Bp, Cp) lane-dense store


@functools.partial(jax.jit, static_argnames=("C",))
def bilstm_forward(x_idx, lut_pack, wts, *, C):
    """x_idx: (T, B) int32 token indices. Returns (B, C) logits."""
    T, B = x_idx.shape
    H = wts.shape[0] // 5

    # pad batch to BP and pair each row with its time-reversed token
    idx_pad = jnp.zeros((T, BP), jnp.int32).at[:, :B].set(x_idx)
    idx2 = jnp.stack([idx_pad, idx_pad[::-1]], axis=-1).reshape(T * BP, 2)

    vmem = pl.BlockSpec(memory_space=pltpu.MemorySpace.VMEM)
    kernel = functools.partial(_bilstm_fused_kernel,
                               T=T, Bp=BP, H=H, Vp=VP, Cp=CP)
    out = pl.pallas_call(
        kernel,
        out_shape=jax.ShapeDtypeStruct((BP, CP), jnp.float32),
        in_specs=[vmem, vmem, vmem],
        out_specs=vmem,
    )(idx2, lut_pack, wts)
    return out[:B, :C]


# ----------------------------------------------------------------------------
# Parameters: raw (PyTorch layout) + one-time packing into the kernel layout.
# ----------------------------------------------------------------------------
def make_raw_params(key, V, D, H, C, B):
    keys = jax.random.split(key, 15)
    k = 1.0 / jnp.sqrt(H)

    def u(kk, shape):
        return jax.random.uniform(kk, shape, jnp.float32, -k, k)

    return {
        "embed_w": jax.random.normal(keys[0], (V, D), jnp.float32),
        "w_ih_f": u(keys[1], (4 * H, D)),
        "w_hh_f": u(keys[2], (4 * H, H)),
        "b_ih_f": u(keys[3], (4 * H,)),
        "b_hh_f": u(keys[4], (4 * H,)),
        "w_ih_b": u(keys[5], (4 * H, D)),
        "w_hh_b": u(keys[6], (4 * H, H)),
        "b_ih_b": u(keys[7], (4 * H,)),
        "b_hh_b": u(keys[8], (4 * H,)),
        "w1": u(keys[9], (H, 2 * H)),
        "b1": u(keys[10], (H,)),
        "w2": u(keys[11], (C, H)),
        "b2": u(keys[12], (C,)),
        # self.hidden = init_hidden(batch_size): randn (2, B, H) for h0 / c0
        "h0": jax.random.normal(keys[13], (2, B, H), jnp.float32),
        "c0": jax.random.normal(keys[14], (2, B, H), jnp.float32),
    }


def prep_params(raw, *, max_norm, Vp=VP, Bp=BP):
    """One-time packing: fold embedding renorm + W_ih + biases into a token
    LUT, permute gate columns, block-structure W_hh, pack everything into
    one f32 and one bf16 buffer."""
    V, _ = raw["embed_w"].shape
    H = raw["w_hh_f"].shape[1]
    C = raw["w2"].shape[0]
    B = raw["h0"].shape[1]
    G8 = 8 * H

    def ifog(x):
        # torch gate-block order (i, f, g, o) -> (i, f, o, g) on leading axis
        return jnp.concatenate([x[:2 * H], x[3 * H:4 * H], x[2 * H:3 * H]],
                               axis=0)

    def interleave(fwd, bwd):
        # (N,4H)+(N,4H), groups [i,f,o,g] -> (N,8H) [i_f,i_b,f_f,f_b,o_f,o_b,g_f,g_b]
        parts = []
        for k in range(4):
            parts += [fwd[:, k * H:(k + 1) * H], bwd[:, k * H:(k + 1) * H]]
        return jnp.concatenate(parts, axis=1)

    # embedding rows with nn.Embedding(max_norm=...) forward-time rescale
    emb = raw["embed_w"]
    nrm = jnp.sqrt(jnp.sum(emb * emb, axis=-1, keepdims=True))
    emb = emb * jnp.where(nrm > max_norm, max_norm / (nrm + 1e-7), 1.0)

    # token LUT: renormed_emb @ W_ih^T + (b_ih + b_hh), gate-reordered.
    lut_f = emb @ ifog(raw["w_ih_f"]).T + ifog(raw["b_ih_f"] + raw["b_hh_f"])[None, :]
    lut_b = emb @ ifog(raw["w_ih_b"]).T + ifog(raw["b_ih_b"] + raw["b_hh_b"])[None, :]
    z = jnp.zeros_like(lut_f)
    lut2 = jnp.zeros((2 * Vp, G8), jnp.float32)
    lut2 = lut2.at[:V].set(interleave(lut_f, z))            # fwd-token rows
    lut2 = lut2.at[Vp:Vp + V].set(interleave(z, lut_b))     # bwd-token rows

    def pack_state(s):  # (2, B, H) -> (Bp, 8H) rows, lanes [fwd | bwd]
        buf = jnp.zeros((Bp, G8), jnp.float32)
        return buf.at[:B, :H].set(s[0]).at[:B, H:2 * H].set(s[1])

    b1 = jnp.zeros((1, G8), jnp.float32).at[0, :H].set(raw["b1"])
    b2 = jnp.zeros((1, G8), jnp.float32).at[0, :C].set(raw["b2"])
    pad = jnp.zeros((6, G8), jnp.float32)   # pad rows to a multiple of 8
    lut_pack = jnp.concatenate(
        [lut2, pack_state(raw["h0"]), pack_state(raw["c0"]), b1, b2, pad],
        axis=0)                                             # (2Vp+24, 8H) f32

    # block-structured recurrent weights + head weights, bf16 for the MXU
    z4 = jnp.zeros((H, 4 * H), jnp.float32)
    whh = jnp.concatenate(
        [interleave(ifog(raw["w_hh_f"]).T, z4),
         interleave(z4, ifog(raw["w_hh_b"]).T)], axis=0)    # (2H, 8H)
    w1p = jnp.zeros((2 * H, G8), jnp.float32).at[:, :H].set(raw["w1"].T)
    w2p = jnp.zeros((H, G8), jnp.float32).at[:, :C].set(raw["w2"].T)
    wts = jnp.concatenate([whh, w1p, w2p], axis=0).astype(jnp.bfloat16)  # (5H,8H)

    return {"lut_pack": lut_pack, "wts": wts}


# ----------------------------------------------------------------------------
# Pure-JAX reference (same math as the PyTorch module) for a sanity check.
# ----------------------------------------------------------------------------
def reference_forward(x_idx, raw, max_norm):
    T, _ = x_idx.shape
    emb = raw["embed_w"][x_idx]                                   # (T, B, D)
    n = jnp.sqrt(jnp.sum(emb * emb, axis=-1, keepdims=True))
    emb = emb * jnp.where(n > max_norm, max_norm / (n + 1e-7), 1.0)

    def cell(x, h, c, wih, whh, bih, bhh):
        g = x @ wih.T + h @ whh.T + bih + bhh
        i, f, gg, o = jnp.split(g, 4, axis=-1)
        i, f, o = jax.nn.sigmoid(i), jax.nn.sigmoid(f), jax.nn.sigmoid(o)
        c = f * c + i * jnp.tanh(gg)
        return o * jnp.tanh(c), c

    h_f, c_f = raw["h0"][0], raw["c0"][0]
    h_b, c_b = raw["h0"][1], raw["c0"][1]
    outs_f, outs_b = [], []
    for t in range(T):
        h_f, c_f = cell(emb[t], h_f, c_f, raw["w_ih_f"], raw["w_hh_f"],
                        raw["b_ih_f"], raw["b_hh_f"])
        outs_f.append(h_f)
    for t in range(T - 1, -1, -1):
        h_b, c_b = cell(emb[t], h_b, c_b, raw["w_ih_b"], raw["w_hh_b"],
                        raw["b_ih_b"], raw["b_hh_b"])
        outs_b.append(h_b)
    out_f = jnp.stack(outs_f)                                     # (T, B, H)
    out_b = jnp.stack(outs_b[::-1])                               # (T, B, H)
    pooled = jnp.max(jnp.concatenate([out_f, out_b], axis=-1), axis=0)
    y = jnp.tanh(pooled) @ raw["w1"].T + raw["b1"]
    y = jnp.tanh(y) @ raw["w2"].T + raw["b2"]
    return y


if __name__ == "__main__":
    # embed_num V=50, embed_dim D=16, lstm_hidden_dim H=32, class_num C=3,
    # seq_len T=8, batch B=2, max_norm=5.0
    V, D, H, C = 50, 16, 32, 3
    T, B = 8, 2
    MAX_NORM = 5.0

    key = jax.random.PRNGKey(0)
    k_idx, k_par = jax.random.split(key)
    raw = make_raw_params(k_par, V, D, H, C, B)
    params = prep_params(raw, max_norm=MAX_NORM)   # one-time packing
    x_idx = jax.random.randint(k_idx, (T, B), 0, V, dtype=jnp.int32)

    logit = jax.block_until_ready(
        bilstm_forward(x_idx, params["lut_pack"], params["wts"], C=C))

    assert logit.shape == (B, C), logit.shape
    assert logit.dtype == jnp.float32
    assert bool(jnp.all(jnp.isfinite(logit)))

    ref = jax.block_until_ready(reference_forward(x_idx, raw, MAX_NORM))
    assert jnp.allclose(logit, ref, atol=3e-2, rtol=3e-2), (logit, ref)

    print("KERNEL_OK")
</pallas_src>

<mosaic_0001>
module attributes {stable_mosaic.version = 11 : i64} {
  func.func @_bilstm_fused_kernel(%arg0: memref<64x2xi32, #tpu.memory_space<vmem>>, %arg1: memref<280x256xf32, #tpu.memory_space<vmem>>, %arg2: memref<160x256xbf16, #tpu.memory_space<vmem>>, %arg3: memref<8x128xf32, #tpu.memory_space<vmem>>) attributes {dimension_semantics = [], scalar_prefetch = 0 : i64, scratch_operands = 0 : i64, tpu.core_type = #tpu.core_type<tc>} {
    %0 = tpu.iota {dimensions = array<i32: 1>} : vector<64x128xi32>
    %c0 = arith.constant 0 : index
    %c0_0 = arith.constant 0 : index
    %1 = vector.load %arg0[%c0, %c0_0] : memref<64x2xi32, #tpu.memory_space<vmem>>, vector<64x1xi32>
    %2 = vector.broadcast %1 : vector<64x1xi32> to vector<64x128xi32>
    %3 = arith.cmpi eq, %0, %2 : vector<64x128xi32>
    %c0_1 = arith.constant 0 : index
    %c1 = arith.constant 1 : index
    %4 = vector.load %arg0[%c0_1, %c1] : memref<64x2xi32, #tpu.memory_space<vmem>>, vector<64x1xi32>
    %5 = vector.broadcast %4 : vector<64x1xi32> to vector<64x128xi32>
    %6 = arith.cmpi eq, %0, %5 : vector<64x128xi32>
    %7 = tpu.concatenate %3, %6 in 1 : vector<64x128xi1>, vector<64x128xi1> -> vector<64x256xi1>
    %8 = arith.extui %7 : vector<64x256xi1> to vector<64x256xi32>
    %9 = arith.sitofp %8 : vector<64x256xi32> to vector<64x256xf32>
    %c0_2 = arith.constant 0 : index
    %c0_3 = arith.constant 0 : index
    %10 = vector.load %arg1[%c0_2, %c0_3] : memref<280x256xf32, #tpu.memory_space<vmem>>, vector<256x256xf32>
    %cst = arith.constant dense<0.000000e+00> : vector<64x256xf32>
    %11 = tpu.matmul %9, %10, %cst {dimension_numbers = #tpu.dot_dimension_numbers<[1], [0], [0], [1], [0, 0, 1, 1], [], []>} : vector<64x256xf32>, vector<256x256xf32>, vector<64x256xf32> -> vector<64x256xf32>
    %c256 = arith.constant 256 : index
    %c0_4 = arith.constant 0 : index
    %12 = vector.load %arg1[%c256, %c0_4] : memref<280x256xf32, #tpu.memory_space<vmem>>, vector<16x256xf32>
    %13 = vector.extract_strided_slice %12 {offsets = [0, 0], sizes = [8, 64], strides = [1, 1]} : vector<16x256xf32> to vector<8x64xf32>
    %14 = vector.extract_strided_slice %12 {offsets = [8, 0], sizes = [8, 64], strides = [1, 1]} : vector<16x256xf32> to vector<8x64xf32>
    %c272 = arith.constant 272 : index
    %c0_5 = arith.constant 0 : index
    %15 = vector.load %arg1[%c272, %c0_5] : memref<280x256xf32, #tpu.memory_space<vmem>>, vector<2x256xf32>
    %16 = vector.extract_strided_slice %15 {offsets = [0, 0], sizes = [1, 32], strides = [1, 1]} : vector<2x256xf32> to vector<1x32xf32>
    %17 = vector.extract_strided_slice %15 {offsets = [1, 0], sizes = [1, 128], strides = [1, 1]} : vector<2x256xf32> to vector<1x128xf32>
    %c0_6 = arith.constant 0 : index
    %c0_7 = arith.constant 0 : index
    %18 = vector.load %arg2[%c0_6, %c0_7] : memref<160x256xbf16, #tpu.memory_space<vmem>>, vector<64x256xbf16>
    %c64 = arith.constant 64 : index
    %c0_8 = arith.constant 0 : index
    %19 = vector.load %arg2[%c64, %c0_8] : memref<160x256xbf16, #tpu.memory_space<vmem>>, vector<96x256xbf16>
    %20 = vector.extract_strided_slice %19 {offsets = [0, 0], sizes = [64, 32], strides = [1, 1]} : vector<96x256xbf16> to vector<64x32xbf16>
    %21 = vector.extract_strided_slice %19 {offsets = [64, 0], sizes = [32, 128], strides = [1, 1]} : vector<96x256xbf16> to vector<32x128xbf16>
    %22 = vector.extract_strided_slice %11 {offsets = [0, 0], sizes = [8, 256], strides = [1, 1]} : vector<64x256xf32> to vector<8x256xf32>
    %23 = arith.truncf %13 : vector<8x64xf32> to vector<8x64xbf16>
    %cst_9 = arith.constant dense<0.000000e+00> : vector<8x256xf32>
    %24 = tpu.matmul %23, %18, %cst_9 {dimension_numbers = #tpu.dot_dimension_numbers<[1], [0], [0], [1], [0, 0, 1, 1], [], []>} : vector<8x64xbf16>, vector<64x256xbf16>, vector<8x256xf32> -> vector<8x256xf32>
    %25 = arith.addf %22, %24 : vector<8x256xf32>
    %26 = vector.extract_strided_slice %25 {offsets = [0, 0], sizes = [8, 192], strides = [1, 1]} : vector<8x256xf32> to vector<8x192xf32>
    %27 = arith.negf %26 : vector<8x192xf32>
    %28 = math.exp %27 : vector<8x192xf32>
    %cst_10 = arith.constant 1.000000e+00 : f32
    %29 = vector.broadcast %cst_10 : f32 to vector<8x192xf32>
    %30 = arith.addf %29, %28 : vector<8x192xf32>
    %31 = arith.divf %29, %30 : vector<8x192xf32>
    %32 = vector.extract_strided_slice %25 {offsets = [0, 192], sizes = [8, 64], strides = [1, 1]} : vector<8x256xf32> to vector<8x64xf32>
    %33 = math.tanh %32 : vector<8x64xf32>
    %34 = vector.extract_strided_slice %31 {offsets = [0, 64], sizes = [8, 64], strides = [1, 1]} : vector<8x192xf32> to vector<8x64xf32>
    %35 = arith.mulf %34, %14 : vector<8x64xf32>
    %36 = vector.extract_strided_slice %31 {offsets = [0, 0], sizes = [8, 64], strides = [1, 1]} : vector<8x192xf32> to vector<8x64xf32>
    %37 = arith.mulf %36, %33 : vector<8x64xf32>
    %38 = arith.addf %35, %37 : vector<8x64xf32>
    %39 = vector.extract_strided_slice %31 {offsets = [0, 128], sizes = [8, 64], strides = [1, 1]} : vector<8x192xf32> to vector<8x64xf32>
    %40 = math.tanh %38 : vector<8x64xf32>
    %41 = arith.mulf %39, %40 : vector<8x64xf32>
    %42 = vector.extract_strided_slice %11 {offsets = [8, 0], sizes = [8, 256], strides = [1, 1]} : vector<64x256xf32> to vector<8x256xf32>
    %43 = arith.truncf %41 : vector<8x64xf32> to vector<8x64xbf16>
    %cst_11 = arith.constant dense<0.000000e+00> : vector<8x256xf32>
    %44 = tpu.matmul %43, %18, %cst_11 {dimension_numbers = #tpu.dot_dimension_numbers<[1], [0], [0], [1], [0, 0, 1, 1], [], []>} : vector<8x64xbf16>, vector<64x256xbf16>, vector<8x256xf32> -> vector<8x256xf32>
    %45 = arith.addf %42, %44 : vector<8x256xf32>
    %46 = vector.extract_strided_slice %45 {offsets = [0, 0], sizes = [8, 192], strides = [1, 1]} : vector<8x256xf32> to vector<8x192xf32>
    %47 = arith.negf %46 : vector<8x192xf32>
    %48 = math.exp %47 : vector<8x192xf32>
    %cst_12 = arith.constant 1.000000e+00 : f32
    %49 = vector.broadcast %cst_12 : f32 to vector<8x192xf32>
    %50 = arith.addf %49, %48 : vector<8x192xf32>
    %51 = arith.divf %49, %50 : vector<8x192xf32>
    %52 = vector.extract_strided_slice %45 {offsets = [0, 192], sizes = [8, 64], strides = [1, 1]} : vector<8x256xf32> to vector<8x64xf32>
    %53 = math.tanh %52 : vector<8x64xf32>
    %54 = vector.extract_strided_slice %51 {offsets = [0, 64], sizes = [8, 64], strides = [1, 1]} : vector<8x192xf32> to vector<8x64xf32>
    %55 = arith.mulf %54, %38 : vector<8x64xf32>
    %56 = vector.extract_strided_slice %51 {offsets = [0, 0], sizes = [8, 64], strides = [1, 1]} : vector<8x192xf32> to vector<8x64xf32>
    %57 = arith.mulf %56, %53 : vector<8x64xf32>
    %58 = arith.addf %55, %57 : vector<8x64xf32>
    %59 = vector.extract_strided_slice %51 {offsets = [0, 128], sizes = [8, 64], strides = [1, 1]} : vector<8x192xf32> to vector<8x64xf32>
    %60 = math.tanh %58 : vector<8x64xf32>
    %61 = arith.mulf %59, %60 : vector<8x64xf32>
    %62 = arith.maximumf %41, %61 : vector<8x64xf32>
    %63 = vector.extract_strided_slice %11 {offsets = [16, 0], sizes = [8, 256], strides = [1, 1]} : vector<64x256xf32> to vector<8x256xf32>
    %64 = arith.truncf %61 : vector<8x64xf32> to vector<8x64xbf16>
    %cst_13 = arith.constant dense<0.000000e+00> : vector<8x256xf32>
    %65 = tpu.matmul %64, %18, %cst_13 {dimension_numbers = #tpu.dot_dimension_numbers<[1], [0], [0], [1], [0, 0, 1, 1], [], []>} : vector<8x64xbf16>, vector<64x256xbf16>, vector<8x256xf32> -> vector<8x256xf32>
    %66 = arith.addf %63, %65 : vector<8x256xf32>
    %67 = vector.extract_strided_slice %66 {offsets = [0, 0], sizes = [8, 192], strides = [1, 1]} : vector<8x256xf32> to vector<8x192xf32>
    %68 = arith.negf %67 : vector<8x192xf32>
    %69 = math.exp %68 : vector<8x192xf32>
    %cst_14 = arith.constant 1.000000e+00 : f32
    %70 = vector.broadcast %cst_14 : f32 to vector<8x192xf32>
    %71 = arith.addf %70, %69 : vector<8x192xf32>
    %72 = arith.divf %70, %71 : vector<8x192xf32>
    %73 = vector.extract_strided_slice %66 {offsets = [0, 192], sizes = [8, 64], strides = [1, 1]} : vector<8x256xf32> to vector<8x64xf32>
    %74 = math.tanh %73 : vector<8x64xf32>
    %75 = vector.extract_strided_slice %72 {offsets = [0, 64], sizes = [8, 64], strides = [1, 1]} : vector<8x192xf32> to vector<8x64xf32>
    %76 = arith.mulf %75, %58 : vector<8x64xf32>
    %77 = vector.extract_strided_slice %72 {offsets = [0, 0], sizes = [8, 64], strides = [1, 1]} : vector<8x192xf32> to vector<8x64xf32>
    %78 = arith.mulf %77, %74 : vector<8x64xf32>
    %79 = arith.addf %76, %78 : vector<8x64xf32>
    %80 = vector.extract_strided_slice %72 {offsets = [0, 128], sizes = [8, 64], strides = [1, 1]} : vector<8x192xf32> to vector<8x64xf32>
    %81 = math.tanh %79 : vector<8x64xf32>
    %82 = arith.mulf %80, %81 : vector<8x64xf32>
    %83 = arith.maximumf %62, %82 : vector<8x64xf32>
    %84 = vector.extract_strided_slice %11 {offsets = [24, 0], sizes = [8, 256], strides = [1, 1]} : vector<64x256xf32> to vector<8x256xf32>
    %85 = arith.truncf %82 : vector<8x64xf32> to vector<8x64xbf16>
    %cst_15 = arith.constant dense<0.000000e+00> : vector<8x256xf32>
    %86 = tpu.matmul %85, %18, %cst_15 {dimension_numbers = #tpu.dot_dimension_numbers<[1], [0], [0], [1], [0, 0, 1, 1], [], []>} : vector<8x64xbf16>, vector<64x256xbf16>, vector<8x256xf32> -> vector<8x256xf32>
    %87 = arith.addf %84, %86 : vector<8x256xf32>
    %88 = vector.extract_strided_slice %87 {offsets = [0, 0], sizes = [8, 192], strides = [1, 1]} : vector<8x256xf32> to vector<8x192xf32>
    %89 = arith.negf %88 : vector<8x192xf32>
    %90 = math.exp %89 : vector<8x192xf32>
    %cst_16 = arith.constant 1.000000e+00 : f32
    %91 = vector.broadcast %cst_16 : f32 to vector<8x192xf32>
    %92 = arith.addf %91, %90 : vector<8x192xf32>
    %93 = arith.divf %91, %92 : vector<8x192xf32>
    %94 = vector.extract_strided_slice %87 {offsets = [0, 192], sizes = [8, 64], strides = [1, 1]} : vector<8x256xf32> to vector<8x64xf32>
    %95 = math.tanh %94 : vector<8x64xf32>
    %96 = vector.extract_strided_slice %93 {offsets = [0, 64], sizes = [8, 64], strides = [1, 1]} : vector<8x192xf32> to vector<8x64xf32>
    %97 = arith.mulf %96, %79 : vector<8x64xf32>
    %98 = vector.extract_strided_slice %93 {offsets = [0, 0], sizes = [8, 64], strides = [1, 1]} : vector<8x192xf32> to vector<8x64xf32>
    %99 = arith.mulf %98, %95 : vector<8x64xf32>
    %100 = arith.addf %97, %99 : vector<8x64xf32>
    %101 = vector.extract_strided_slice %93 {offsets = [0, 128], sizes = [8, 64], strides = [1, 1]} : vector<8x192xf32> to vector<8x64xf32>
    %102 = math.tanh %100 : vector<8x64xf32>
    %103 = arith.mulf %101, %102 : vector<8x64xf32>
    %104 = arith.maximumf %83, %103 : vector<8x64xf32>
    %105 = vector.extract_strided_slice %11 {offsets = [32, 0], sizes = [8, 256], strides = [1, 1]} : vector<64x256xf32> to vector<8x256xf32>
    %106 = arith.truncf %103 : vector<8x64xf32> to vector<8x64xbf16>
    %cst_17 = arith.constant dense<0.000000e+00> : vector<8x256xf32>
    %107 = tpu.matmul %106, %18, %cst_17 {dimension_numbers = #tpu.dot_dimension_numbers<[1], [0], [0], [1], [0, 0, 1, 1], [], []>} : vector<8x64xbf16>, vector<64x256xbf16>, vector<8x256xf32> -> vector<8x256xf32>
    %108 = arith.addf %105, %107 : vector<8x256xf32>
    %109 = vector.extract_strided_slice %108 {offsets = [0, 0], sizes = [8, 192], strides = [1, 1]} : vector<8x256xf32> to vector<8x192xf32>
    %110 = arith.negf %109 : vector<8x192xf32>
    %111 = math.exp %110 : vector<8x192xf32>
    %cst_18 = arith.constant 1.000000e+00 : f32
    %112 = vector.broadcast %cst_18 : f32 to vector<8x192xf32>
    %113 = arith.addf %112, %111 : vector<8x192xf32>
    %114 = arith.divf %112, %113 : vector<8x192xf32>
    %115 = vector.extract_strided_slice %108 {offsets = [0, 192], sizes = [8, 64], strides = [1, 1]} : vector<8x256xf32> to vector<8x64xf32>
    %116 = math.tanh %115 : vector<8x64xf32>
    %117 = vector.extract_strided_slice %114 {offsets = [0, 64], sizes = [8, 64], strides = [1, 1]} : vector<8x192xf32> to vector<8x64xf32>
    %118 = arith.mulf %117, %100 : vector<8x64xf32>
    %119 = vector.extract_strided_slice %114 {offsets = [0, 0], sizes = [8, 64], strides = [1, 1]} : vector<8x192xf32> to vector<8x64xf32>
    %120 = arith.mulf %119, %116 : vector<8x64xf32>
    %121 = arith.addf %118, %120 : vector<8x64xf32>
    %122 = vector.extract_strided_slice %114 {offsets = [0, 128], sizes = [8, 64], strides = [1, 1]} : vector<8x192xf32> to vector<8x64xf32>
    %123 = math.tanh %121 : vector<8x64xf32>
    %124 = arith.mulf %122, %123 : vector<8x64xf32>
    %125 = arith.maximumf %104, %124 : vector<8x64xf32>
    %126 = vector.extract_strided_slice %11 {offsets = [40, 0], sizes = [8, 256], strides = [1, 1]} : vector<64x256xf32> to vector<8x256xf32>
    %127 = arith.truncf %124 : vector<8x64xf32> to vector<8x64xbf16>
    %cst_19 = arith.constant dense<0.000000e+00> : vector<8x256xf32>
    %128 = tpu.matmul %127, %18, %cst_19 {dimension_numbers = #tpu.dot_dimension_numbers<[1], [0], [0], [1], [0, 0, 1, 1], [], []>} : vector<8x64xbf16>, vector<64x256xbf16>, vector<8x256xf32> -> vector<8x256xf32>
    %129 = arith.addf %126, %128 : vector<8x256xf32>
    %130 = vector.extract_strided_slice %129 {offsets = [0, 0], sizes = [8, 192], strides = [1, 1]} : vector<8x256xf32> to vector<8x192xf32>
    %131 = arith.negf %130 : vector<8x192xf32>
    %132 = math.exp %131 : vector<8x192xf32>
    %cst_20 = arith.constant 1.000000e+00 : f32
    %133 = vector.broadcast %cst_20 : f32 to vector<8x192xf32>
    %134 = arith.addf %133, %132 : vector<8x192xf32>
    %135 = arith.divf %133, %134 : vector<8x192xf32>
    %136 = vector.extract_strided_slice %129 {offsets = [0, 192], sizes = [8, 64], strides = [1, 1]} : vector<8x256xf32> to vector<8x64xf32>
    %137 = math.tanh %136 : vector<8x64xf32>
    %138 = vector.extract_strided_slice %135 {offsets = [0, 64], sizes = [8, 64], strides = [1, 1]} : vector<8x192xf32> to vector<8x64xf32>
    %139 = arith.mulf %138, %121 : vector<8x64xf32>
    %140 = vector.extract_strided_slice %135 {offsets = [0, 0], sizes = [8, 64], strides = [1, 1]} : vector<8x192xf32> to vector<8x64xf32>
    %141 = arith.mulf %140, %137 : vector<8x64xf32>
    %142 = arith.addf %139, %141 : vector<8x64xf32>
    %143 = vector.extract_strided_slice %135 {offsets = [0, 128], sizes = [8, 64], strides = [1, 1]} : vector<8x192xf32> to vector<8x64xf32>
    %144 = math.tanh %142 : vector<8x64xf32>
    %145 = arith.mulf %143, %144 : vector<8x64xf32>
    %146 = arith.maximumf %125, %145 : vector<8x64xf32>
    %147 = vector.extract_strided_slice %11 {offsets = [48, 0], sizes = [8, 256], strides = [1, 1]} : vector<64x256xf32> to vector<8x256xf32>
    %148 = arith.truncf %145 : vector<8x64xf32> to vector<8x64xbf16>
    %cst_21 = arith.constant dense<0.000000e+00> : vector<8x256xf32>
    %149 = tpu.matmul %148, %18, %cst_21 {dimension_numbers = #tpu.dot_dimension_numbers<[1], [0], [0], [1], [0, 0, 1, 1], [], []>} : vector<8x64xbf16>, vector<64x256xbf16>, vector<8x256xf32> -> vector<8x256xf32>
    %150 = arith.addf %147, %149 : vector<8x256xf32>
    %151 = vector.extract_strided_slice %150 {offsets = [0, 0], sizes = [8, 192], strides = [1, 1]} : vector<8x256xf32> to vector<8x192xf32>
    %152 = arith.negf %151 : vector<8x192xf32>
    %153 = math.exp %152 : vector<8x192xf32>
    %cst_22 = arith.constant 1.000000e+00 : f32
    %154 = vector.broadcast %cst_22 : f32 to vector<8x192xf32>
    %155 = arith.addf %154, %153 : vector<8x192xf32>
    %156 = arith.divf %154, %155 : vector<8x192xf32>
    %157 = vector.extract_strided_slice %150 {offsets = [0, 192], sizes = [8, 64], strides = [1, 1]} : vector<8x256xf32> to vector<8x64xf32>
    %158 = math.tanh %157 : vector<8x64xf32>
    %159 = vector.extract_strided_slice %156 {offsets = [0, 64], sizes = [8, 64], strides = [1, 1]} : vector<8x192xf32> to vector<8x64xf32>
    %160 = arith.mulf %159, %142 : vector<8x64xf32>
    %161 = vector.extract_strided_slice %156 {offsets = [0, 0], sizes = [8, 64], strides = [1, 1]} : vector<8x192xf32> to vector<8x64xf32>
    %162 = arith.mulf %161, %158 : vector<8x64xf32>
    %163 = arith.addf %160, %162 : vector<8x64xf32>
    %164 = vector.extract_strided_slice %156 {offsets = [0, 128], sizes = [8, 64], strides = [1, 1]} : vector<8x192xf32> to vector<8x64xf32>
    %165 = math.tanh %163 : vector<8x64xf32>
    %166 = arith.mulf %164, %165 : vector<8x64xf32>
    %167 = arith.maximumf %146, %166 : vector<8x64xf32>
    %168 = vector.extract_strided_slice %11 {offsets = [56, 0], sizes = [8, 256], strides = [1, 1]} : vector<64x256xf32> to vector<8x256xf32>
    %169 = arith.truncf %166 : vector<8x64xf32> to vector<8x64xbf16>
    %cst_23 = arith.constant dense<0.000000e+00> : vector<8x256xf32>
    %170 = tpu.matmul %169, %18, %cst_23 {dimension_numbers = #tpu.dot_dimension_numbers<[1], [0], [0], [1], [0, 0, 1, 1], [], []>} : vector<8x64xbf16>, vector<64x256xbf16>, vector<8x256xf32> -> vector<8x256xf32>
    %171 = arith.addf %168, %170 : vector<8x256xf32>
    %172 = vector.extract_strided_slice %171 {offsets = [0, 0], sizes = [8, 192], strides = [1, 1]} : vector<8x256xf32> to vector<8x192xf32>
    %173 = arith.negf %172 : vector<8x192xf32>
    %174 = math.exp %173 : vector<8x192xf32>
    %cst_24 = arith.constant 1.000000e+00 : f32
    %175 = vector.broadcast %cst_24 : f32 to vector<8x192xf32>
    %176 = arith.addf %175, %174 : vector<8x192xf32>
    %177 = arith.divf %175, %176 : vector<8x192xf32>
    %178 = vector.extract_strided_slice %171 {offsets = [0, 192], sizes = [8, 64], strides = [1, 1]} : vector<8x256xf32> to vector<8x64xf32>
    %179 = math.tanh %178 : vector<8x64xf32>
    %180 = vector.extract_strided_slice %177 {offsets = [0, 64], sizes = [8, 64], strides = [1, 1]} : vector<8x192xf32> to vector<8x64xf32>
    %181 = arith.mulf %180, %163 : vector<8x64xf32>
    %182 = vector.extract_strided_slice %177 {offsets = [0, 0], sizes = [8, 64], strides = [1, 1]} : vector<8x192xf32> to vector<8x64xf32>
    %183 = arith.mulf %182, %179 : vector<8x64xf32>
    %184 = arith.addf %181, %183 : vector<8x64xf32>
    %185 = vector.extract_strided_slice %177 {offsets = [0, 128], sizes = [8, 64], strides = [1, 1]} : vector<8x192xf32> to vector<8x64xf32>
    %186 = math.tanh %184 : vector<8x64xf32>
    %187 = arith.mulf %185, %186 : vector<8x64xf32>
    %188 = arith.maximumf %167, %187 : vector<8x64xf32>
    %189 = math.tanh %188 : vector<8x64xf32>
    %190 = arith.truncf %189 : vector<8x64xf32> to vector<8x64xbf16>
    %cst_25 = arith.constant dense<0.000000e+00> : vector<8x32xf32>
    %191 = tpu.matmul %190, %20, %cst_25 {dimension_numbers = #tpu.dot_dimension_numbers<[1], [0], [0], [1], [0, 0, 1, 1], [], []>} : vector<8x64xbf16>, vector<64x32xbf16>, vector<8x32xf32> -> vector<8x32xf32>
    %192 = vector.broadcast %16 : vector<1x32xf32> to vector<8x32xf32>
    %193 = arith.addf %191, %192 : vector<8x32xf32>
    %194 = math.tanh %193 : vector<8x32xf32>
    %195 = arith.truncf %194 : vector<8x32xf32> to vector<8x32xbf16>
    %cst_26 = arith.constant dense<0.000000e+00> : vector<8x128xf32>
    %196 = tpu.matmul %195, %21, %cst_26 {dimension_numbers = #tpu.dot_dimension_numbers<[1], [0], [0], [1], [0, 0, 1, 1], [], []>} : vector<8x32xbf16>, vector<32x128xbf16>, vector<8x128xf32> -> vector<8x128xf32>
    %197 = vector.broadcast %17 : vector<1x128xf32> to vector<8x128xf32>
    %198 = arith.addf %196, %197 : vector<8x128xf32>
    %c0_27 = arith.constant 0 : index
    %c0_28 = arith.constant 0 : index
    %199 = vector.load %arg3[%c0_27, %c0_28] : memref<8x128xf32, #tpu.memory_space<vmem>>, vector<8x128xf32>
    tpu.vector_store %arg3[%c0_27, %c0_28], %198 {strides = array<i32>} : memref<8x128xf32, #tpu.memory_space<vmem>>, vector<8x128xf32>,
    return
  }
}

</mosaic_0001>

<llo_original>
// kernel: bilstm_forward.1
$region0: #{bilstm_forward.1}
  #allocation0 [shape = 'u32[]', space=smem, size = 0x4, offset = 0x4, fixed_abs, tag = 'smem constant byte address 0x4 - core index']
  #allocation1 [shape = 'u32[144,128]{1,0:T(1,128)}', space=vmem, size = 0x12000, scoped, tag = 'internal scratch']
  %s0 = inlined_call_operand.vmem [shape: s32[64,2], index: 0, kind: input, shape index: {}]
  %s1 = inlined_call_operand.hbm [shape: f32[280,256], index: 1, kind: input, shape index: {}]
  %s2 = inlined_call_operand.vmem [shape: bf16[160,256], index: 2, kind: input, shape index: {}]
  %s3 = inlined_call_operand.vmem [shape: f32[8,128], index: 3, kind: output, shape index: {}]
  %s4 = sld [smem:[#allocation0]]
  $region26: #{bilstm_forward.1} parent=0
    _
  %s6 = ssub.s32 1, %s4
  %s7 = scalar_select 0, %s6, %s4
  $region1: #{bilstm_forward.1} parent=0
    #allocation2 [shape = 'u8[286720]{0}', space=vmem, size = 0x46000, scoped, tag = 'input window, operand 1, single buffered']
    #allocation3 [shape = 's32[1]{0}', space=sflag, size = 0x4, scoped, tag = 'scoped memory for bilstm_forward.1']
    %8 = vsyncpa [#allocation3], 0
    // Predicated region
    $region2: #{bilstm_forward.1} parent=1 // pred_check
      _
    $region3: #{bilstm_forward.1} parent=1 // pred_check_branch
      %10 = sbr.rel (0) target = $region5
    $region4: #{bilstm_forward.1} parent=1 // pred_region
      _
    $region5: #{bilstm_forward.1} parent=1 // pred_fallthru
      _
    // Predicated region
    $region6: #{bilstm_forward.1} parent=1 // pred_check
      _
    $region7: #{bilstm_forward.1} parent=1 // pred_check_branch
      %12 = sbr.rel (0) target = $region9
    $region8: #{bilstm_forward.1} parent=1 // pred_region
      %s14 = ssub.s32 8960, 8960
      %15 = vsyncadd [#allocation3], %s14
      %s16 = sshll.u32 [#allocation2], 4
      %s17 = int_to_ptr.vmem [resolvable:$true] %s16
      %22 = dma.hbm_to_vmem [thread:$0]  %s1, 8960, %s17, [#allocation3], 256, 256, 16
    $region9: #{bilstm_forward.1} parent=1 // pred_fallthru
      _
    // Predicated region
    $region10: #{bilstm_forward.1} parent=1 // pred_check
      _
    $region11: #{bilstm_forward.1} parent=1 // pred_check_branch
      %24 = sbr.rel (0) target = $region13
    $region12: #{bilstm_forward.1} parent=1 // pred_region
      _
    $region13: #{bilstm_forward.1} parent=1 // pred_fallthru
      _
    // Predicated region
    $region14: #{bilstm_forward.1} parent=1 // pred_check
      _
    $region15: #{bilstm_forward.1} parent=1 // pred_check_branch
      %26 = sbr.rel (0) target = $region17
    $region16: #{bilstm_forward.1} parent=1 // pred_region
      %27 = dma.done [#allocation3], 8960
    $region17: #{bilstm_forward.1} parent=1 // pred_fallthru
      _
    %v29 = vlaneseq
    %v30 = vand.u32 %v29, 127
    %v31 = vld [vmem:[%s0] sm:$0xff]
    %v32 = vld [vmem:[%s0 + $0x8] sm:$0xff]
    %v33 = vld [vmem:[%s0 + $0x10] sm:$0xff]
    %v34 = vld [vmem:[%s0 + $0x18] sm:$0xff]
    %v35 = vld [vmem:[%s0 + $0x20] sm:$0xff]
    %v36 = vld [vmem:[%s0 + $0x28] sm:$0xff]
    %v37 = vld [vmem:[%s0 + $0x30] sm:$0xff]
    %v38 = vld [vmem:[%s0 + $0x38] sm:$0xff]
    %39 = vset.pattern.permute.xlu0 0
    %40 = vperm.xlu0 %39, %v31
    %v41 = vpop.permute.xlu0 %40
    %42 = vset.pattern.permute.xlu0 0
    %43 = vperm.xlu0 %42, %v32
    %v44 = vpop.permute.xlu0 %43
    %45 = vset.pattern.permute.xlu0 0
    %46 = vperm.xlu0 %45, %v33
    %v47 = vpop.permute.xlu0 %46
    %48 = vset.pattern.permute.xlu0 0
    %49 = vperm.xlu0 %48, %v34
    %v50 = vpop.permute.xlu0 %49
    %51 = vset.pattern.permute.xlu0 0
    %52 = vperm.xlu0 %51, %v35
    %v53 = vpop.permute.xlu0 %52
    %54 = vset.pattern.permute.xlu0 0
    %55 = vperm.xlu0 %54, %v36
    %v56 = vpop.permute.xlu0 %55
    %57 = vset.pattern.permute.xlu0 0
    %58 = vperm.xlu0 %57, %v37
    %v59 = vpop.permute.xlu0 %58
    %60 = vset.pattern.permute.xlu0 0
    %61 = vperm.xlu0 %60, %v38
    %v62 = vpop.permute.xlu0 %61
    %vm63 = vcmp.eq.s32.totalorder %v30, %v41
    %vm64 = vcmp.eq.s32.totalorder %v30, %v44
    %vm65 = vcmp.eq.s32.totalorder %v30, %v47
    %vm66 = vcmp.eq.s32.totalorder %v30, %v50
    %vm67 = vcmp.eq.s32.totalorder %v30, %v53
    %vm68 = vcmp.eq.s32.totalorder %v30, %v56
    %vm69 = vcmp.eq.s32.totalorder %v30, %v59
    %vm70 = vcmp.eq.s32.totalorder %v30, %v62
    %71 = vset.pattern.permute.xlu0 1
    %72 = vperm.xlu0 %71, %v31
    %v73 = vpop.permute.xlu0 %72
    %74 = vset.pattern.permute.xlu0 1
    %75 = vperm.xlu0 %74, %v32
    %v76 = vpop.permute.xlu0 %75
    %77 = vset.pattern.permute.xlu0 1
    %78 = vperm.xlu0 %77, %v33
    %v79 = vpop.permute.xlu0 %78
    %80 = vset.pattern.permute.xlu0 1
    %81 = vperm.xlu0 %80, %v34
    %v82 = vpop.permute.xlu0 %81
    %83 = vset.pattern.permute.xlu0 1
    %84 = vperm.xlu0 %83, %v35
    %v85 = vpop.permute.xlu0 %84
    %86 = vset.pattern.permute.xlu0 1
    %87 = vperm.xlu0 %86, %v36
    %v88 = vpop.permute.xlu0 %87
    %89 = vset.pattern.permute.xlu0 1
    %90 = vperm.xlu0 %89, %v37
    %v91 = vpop.permute.xlu0 %90
    %92 = vset.pattern.permute.xlu0 1
    %93 = vperm.xlu0 %92, %v38
    %v94 = vpop.permute.xlu0 %93
    %vm95 = vcmp.eq.s32.totalorder %v30, %v73
    %vm96 = vcmp.eq.s32.totalorder %v30, %v76
    %vm97 = vcmp.eq.s32.totalorder %v30, %v79
    %vm98 = vcmp.eq.s32.totalorder %v30, %v82
    %vm99 = vcmp.eq.s32.totalorder %v30, %v85
    %vm100 = vcmp.eq.s32.totalorder %v30, %v88
    %vm101 = vcmp.eq.s32.totalorder %v30, %v91
    %vm102 = vcmp.eq.s32.totalorder %v30, %v94
    %v103 = vsel %vm63, 1, 0
    %v104 = vsel %vm95, 1, 0
    %v105 = vsel %vm64, 1, 0
    %v106 = vsel %vm96, 1, 0
    %v107 = vsel %vm65, 1, 0
    %v108 = vsel %vm97, 1, 0
    %v109 = vsel %vm66, 1, 0
    %v110 = vsel %vm98, 1, 0
    %v111 = vsel %vm67, 1, 0
    %v112 = vsel %vm99, 1, 0
    %v113 = vsel %vm68, 1, 0
    %v114 = vsel %vm100, 1, 0
    %v115 = vsel %vm69, 1, 0
    %v116 = vsel %vm101, 1, 0
    %v117 = vsel %vm70, 1, 0
    %v118 = vsel %vm102, 1, 0
    %v119 = vcvt.s32.f32 %v103
    %v120 = vcvt.s32.f32 %v104
    %v121 = vcvt.s32.f32 %v105
    %v122 = vcvt.s32.f32 %v106
    %v123 = vcvt.s32.f32 %v107
    %v124 = vcvt.s32.f32 %v108
    %v125 = vcvt.s32.f32 %v109
    %v126 = vcvt.s32.f32 %v110
    %v127 = vcvt.s32.f32 %v111
    %v128 = vcvt.s32.f32 %v112
    %v129 = vcvt.s32.f32 %v113
    %v130 = vcvt.s32.f32 %v114
    %v131 = vcvt.s32.f32 %v115
    %v132 = vcvt.s32.f32 %v116
    %v133 = vcvt.s32.f32 %v117
    %v134 = vcvt.s32.f32 %v118
    %v135 = vld [vmem:[#allocation2] sm:$0xff]
    %v136 = vld [vmem:[#allocation2 + $0x8] sm:$0xff]
    %v137 = vld [vmem:[#allocation2 + $0x10] sm:$0xff]
    %v138 = vld [vmem:[#allocation2 + $0x18] sm:$0xff]
    %v139 = vld [vmem:[#allocation2 + $0x20] sm:$0xff]
    %v140 = vld [vmem:[#allocation2 + $0x28] sm:$0xff]
    %v141 = vld [vmem:[#allocation2 + $0x30] sm:$0xff]
    %v142 = vld [vmem:[#allocation2 + $0x38] sm:$0xff]
    %v143 = vld [vmem:[#allocation2 + $0x40] sm:$0xff]
    %v144 = vld [vmem:[#allocation2 + $0x48] sm:$0xff]
    %v145 = vld [vmem:[#allocation2 + $0x50] sm:$0xff]
    %v146 = vld [vmem:[#allocation2 + $0x58] sm:$0xff]
    %v147 = vld [vmem:[#allocation2 + $0x60] sm:$0xff]
    %v148 = vld [vmem:[#allocation2 + $0x68] sm:$0xff]
    %v149 = vld [vmem:[#allocation2 + $0x70] sm:$0xff]
    %v150 = vld [vmem:[#allocation2 + $0x78] sm:$0xff]
    %v151 = vld [vmem:[#allocation2 + $0x80] sm:$0xff]
    %v152 = vld [vmem:[#allocation2 + $0x88] sm:$0xff]
    %v153 = vld [vmem:[#allocation2 + $0x90] sm:$0xff]
    %v154 = vld [vmem:[#allocation2 + $0x98] sm:$0xff]
    %v155 = vld [vmem:[#allocation2 + $0xa0] sm:$0xff]
    %v156 = vld [vmem:[#allocation2 + $0xa8] sm:$0xff]
    %v157 = vld [vmem:[#allocation2 + $0xb0] sm:$0xff]
    %v158 = vld [vmem:[#allocation2 + $0xb8] sm:$0xff]
    %v159 = vld [vmem:[#allocation2 + $0xc0] sm:$0xff]
    %v160 = vld [vmem:[#allocation2 + $0xc8] sm:$0xff]
    %v161 = vld [vmem:[#allocation2 + $0xd0] sm:$0xff]
    %v162 = vld [vmem:[#allocation2 + $0xd8] sm:$0xff]
    %v163 = vld [vmem:[#allocation2 + $0xe0] sm:$0xff]
    %v164 = vld [vmem:[#allocation2 + $0xe8] sm:$0xff]
    %v165 = vld [vmem:[#allocation2 + $0xf0] sm:$0xff]
    %v166 = vld [vmem:[#allocation2 + $0xf8] sm:$0xff]
    %v167 = vld [vmem:[#allocation2 + $0x100] sm:$0xff]
    %v168 = vld [vmem:[#allocation2 + $0x108] sm:$0xff]
    %v169 = vld [vmem:[#allocation2 + $0x110] sm:$0xff]
    %v170 = vld [vmem:[#allocation2 + $0x118] sm:$0xff]
    %v171 = vld [vmem:[#allocation2 + $0x120] sm:$0xff]
    %v172 = vld [vmem:[#allocation2 + $0x128] sm:$0xff]
    %v173 = vld [vmem:[#allocation2 + $0x130] sm:$0xff]
    %v174 = vld [vmem:[#allocation2 + $0x138] sm:$0xff]
    %v175 = vld [vmem:[#allocation2 + $0x140] sm:$0xff]
    %v176 = vld [vmem:[#allocation2 + $0x148] sm:$0xff]
    %v177 = vld [vmem:[#allocation2 + $0x150] sm:$0xff]
    %v178 = vld [vmem:[#allocation2 + $0x158] sm:$0xff]
    %v179 = vld [vmem:[#allocation2 + $0x160] sm:$0xff]
    %v180 = vld [vmem:[#allocation2 + $0x168] sm:$0xff]
    %v181 = vld [vmem:[#allocation2 + $0x170] sm:$0xff]
    %v182 = vld [vmem:[#allocation2 + $0x178] sm:$0xff]
    %v183 = vld [vmem:[#allocation2 + $0x180] sm:$0xff]
    %v184 = vld [vmem:[#allocation2 + $0x188] sm:$0xff]
    %v185 = vld [vmem:[#allocation2 + $0x190] sm:$0xff]
    %v186 = vld [vmem:[#allocation2 + $0x198] sm:$0xff]
    %v187 = vld [vmem:[#allocation2 + $0x1a0] sm:$0xff]
    %v188 = vld [vmem:[#allocation2 + $0x1a8] sm:$0xff]
    %v189 = vld [vmem:[#allocation2 + $0x1b0] sm:$0xff]
    %v190 = vld [vmem:[#allocation2 + $0x1b8] sm:$0xff]
    %v191 = vld [vmem:[#allocation2 + $0x1c0] sm:$0xff]
    %v192 = vld [vmem:[#allocation2 + $0x1c8] sm:$0xff]
    %v193 = vld [vmem:[#allocation2 + $0x1d0] sm:$0xff]
    %v194 = vld [vmem:[#allocation2 + $0x1d8] sm:$0xff]
    %v195 = vld [vmem:[#allocation2 + $0x1e0] sm:$0xff]
    %v196 = vld [vmem:[#allocation2 + $0x1e8] sm:$0xff]
    %v197 = vld [vmem:[#allocation2 + $0x1f0] sm:$0xff]
    %v198 = vld [vmem:[#allocation2 + $0x1f8] sm:$0xff]
    %199 = vmatprep.subr.mxu0 %v136
    %200 = vmatpush1.msra.mxu0 %v135
    %201 = vmatprep.subr.mxu0 %v138
    %202 = vmatpush1.msra.mxu0 %v137
    %203 = vmatprep.subr.mxu0 %v140
    %204 = vmatpush1.msra.mxu0 %v139
    %205 = vmatprep.subr.mxu0 %v142
    %206 = vmatpush1.msra.mxu0 %v141
    %207 = vmatprep.subr.mxu0 %v144
    %208 = vmatpush1.msra.mxu0 %v143
    %209 = vmatprep.subr.mxu0 %v146
    %210 = vmatpush1.msra.mxu0 %v145
    %211 = vmatprep.subr.mxu0 %v148
    %212 = vmatpush1.msra.mxu0 %v147
    %213 = vmatprep.subr.mxu0 %v150
    %214 = vmatpush1.msra.mxu0 %v149
    %215 = vmatprep.subr.mxu0 %v152
    %216 = vmatpush1.msra.mxu0 %v151
    %217 = vmatprep.subr.mxu0 %v154
    %218 = vmatpush1.msra.mxu0 %v153
    %219 = vmatprep.subr.mxu0 %v156
    %220 = vmatpush1.msra.mxu0 %v155
    %221 = vmatprep.subr.mxu0 %v158
    %222 = vmatpush1.msra.mxu0 %v157
    %223 = vmatprep.subr.mxu0 %v160
    %224 = vmatpush1.msra.mxu0 %v159
    %225 = vmatprep.subr.mxu0 %v162
    %226 = vmatpush1.msra.mxu0 %v161
    %227 = vmatprep.subr.mxu0 %v164
    %228 = vmatpush1.msra.mxu0 %v163
    %229 = vmatprep.subr.mxu0 %v166
    %230 = vmatpush1.msra.mxu0 %v165
    %231 = vmatprep.subr.mxu0 %v168
    %232 = vmatpush1.msra.mxu0 %v167
    %233 = vmatprep.subr.mxu0 %v170
    %234 = vmatpush1.msra.mxu0 %v169
    %235 = vmatprep.subr.mxu0 %v172
    %236 = vmatpush1.msra.mxu0 %v171
    %237 = vmatprep.subr.mxu0 %v174
    %238 = vmatpush1.msra.mxu0 %v173
    %239 = vmatprep.subr.mxu0 %v176
    %240 = vmatpush1.msra.mxu0 %v175
    %241 = vmatprep.subr.mxu0 %v178
    %242 = vmatpush1.msra.mxu0 %v177
    %243 = vmatprep.subr.mxu0 %v180
    %244 = vmatpush1.msra.mxu0 %v179
    %245 = vmatprep.subr.mxu0 %v182
    %246 = vmatpush1.msra.mxu0 %v181
    %247 = vmatprep.subr.mxu0 %v184
    %248 = vmatpush1.msra.mxu0 %v183
    %249 = vmatprep.subr.mxu0 %v186
    %250 = vmatpush1.msra.mxu0 %v185
    %251 = vmatprep.subr.mxu0 %v188
    %252 = vmatpush1.msra.mxu0 %v187
    %253 = vmatprep.subr.mxu0 %v190
    %254 = vmatpush1.msra.mxu0 %v189
    %255 = vmatprep.subr.mxu0 %v192
    %256 = vmatpush1.msra.mxu0 %v191
    %257 = vmatprep.subr.mxu0 %v194
    %258 = vmatpush1.msra.mxu0 %v193
    %259 = vmatprep.subr.mxu0 %v196
    %260 = vmatpush1.msra.mxu0 %v195
    %261 = vmatprep.subr.mxu0 %v198
    %262 = vmatpush1.msra.mxu0 %v197
    %263 = vmatprep.mubr.f32.mxu0 %v120
    %264 = vmatmul.mubr.f32.gmra.mrb[0].mxu0 %v119
    %v265 = vpop.f32.mrb[0].mxu0
    %v266 = vadd.f32 0.0, %v265
    %v267 = vpop.f32.mrb[0].mxu0
    %v268 = vadd.f32 0.0, %v267
    %269 = vmatprep.mubr.f32.mxu0 %v122
    %270 = vmatmul.mubr.f32.gmra.mrb[0].mxu0 %v121
    %v271 = vpop.f32.mrb[0].mxu0
    %v272 = vadd.f32 0.0, %v271
    %v273 = vpop.f32.mrb[0].mxu0
    %v274 = vadd.f32 0.0, %v273
    %275 = vmatprep.mubr.f32.mxu0 %v124
    %276 = vmatmul.mubr.f32.gmra.mrb[0].mxu0 %v123
    %v277 = vpop.f32.mrb[0].mxu0
    %v278 = vadd.f32 0.0, %v277
    %v279 = vpop.f32.mrb[0].mxu0
    %v280 = vadd.f32 0.0, %v279
    %281 = vmatprep.mubr.f32.mxu0 %v126
    %282 = vmatmul.mubr.f32.gmra.mrb[0].mxu0 %v125
    %v283 = vpop.f32.mrb[0].mxu0
    %v284 = vadd.f32 0.0, %v283
    %v285 = vpop.f32.mrb[0].mxu0
    %v286 = vadd.f32 0.0, %v285
    %287 = vmatprep.mubr.f32.mxu0 %v128
    %288 = vmatmul.mubr.f32.gmra.mrb[0].mxu0 %v127
    %v289 = vpop.f32.mrb[0].mxu0
    %v290 = vadd.f32 0.0, %v289
    %v291 = vpop.f32.mrb[0].mxu0
    %v292 = vadd.f32 0.0, %v291
    %293 = vmatprep.mubr.f32.mxu0 %v130
    %294 = vmatmul.mubr.f32.gmra.mrb[0].mxu0 %v129
    %v295 = vpop.f32.mrb[0].mxu0
    %v296 = vadd.f32 0.0, %v295
    %v297 = vpop.f32.mrb[0].mxu0
    %v298 = vadd.f32 0.0, %v297
    %299 = vmatprep.mubr.f32.mxu0 %v132
    %300 = vmatmul.mubr.f32.gmra.mrb[0].mxu0 %v131
    %v301 = vpop.f32.mrb[0].mxu0
    %v302 = vadd.f32 0.0, %v301
    %v303 = vpop.f32.mrb[0].mxu0
    %v304 = vadd.f32 0.0, %v303
    %305 = vmatprep.mubr.f32.mxu0 %v134
    %306 = vmatmul.mubr.f32.gmra.mrb[0].mxu0 %v133
    %v307 = vpop.f32.mrb[0].mxu0
    %v308 = vadd.f32 0.0, %v307
    %v309 = vpop.f32.mrb[0].mxu0
    %v310 = vadd.f32 0.0, %v309
    %311 = vdwg.mxu0
    %v312 = vld [vmem:[#allocation2 + $0x200] sm:$0xff]
    %v313 = vld [vmem:[#allocation2 + $0x210] sm:$0xff]
    %v314 = vld [vmem:[#allocation2 + $0x220] sm:$0x3]
    %v315 = vld [vmem:[%s2] sm:$0xff]
    %v316 = vld [vmem:[%s2 + $0x8] sm:$0xff]
    %v317 = vld [vmem:[%s2 + $0x10] sm:$0xff]
    %v318 = vld [vmem:[%s2 + $0x18] sm:$0xff]
    %v319 = vld [vmem:[%s2 + $0x20] sm:$0xff]
    %v320 = vld [vmem:[%s2 + $0x28] sm:$0xff]
    %v321 = vld [vmem:[%s2 + $0x30] sm:$0xff]
    %v322 = vld [vmem:[%s2 + $0x38] sm:$0xff]
    %v323 = vld [vmem:[%s2 + $0x40] sm:$0xff]
    %v324 = vld [vmem:[%s2 + $0x48] sm:$0xff]
    %v325 = vld [vmem:[%s2 + $0x50] sm:$0xff]
    %v326 = vld [vmem:[%s2 + $0x58] sm:$0xff]
    %v327 = vld [vmem:[%s2 + $0x60] sm:$0xff]
    %v328 = vld [vmem:[%s2 + $0x68] sm:$0xff]
    %v329 = vld [vmem:[%s2 + $0x70] sm:$0xff]
    %v330 = vld [vmem:[%s2 + $0x78] sm:$0xff]
    %v331 = vld [vmem:[%s2 + $0x80] sm:$0xff]
    %v332 = vld [vmem:[%s2 + $0x88] sm:$0xff]
    %v333 = vld [vmem:[%s2 + $0x90] sm:$0xff]
    %v334 = vld [vmem:[%s2 + $0x98] sm:$0xff]
    %v335 = vpack.c.bf16 %v312, %v312
    %v344 = vunpack.c.l.b16 %v315
    %v345 = vunpack.c.h.b16 %v315
    %v346 = vunpack.c.l.b16 %v316
    %v347 = vunpack.c.h.b16 %v316
    %v348 = vunpack.c.l.b16 %v317
    %v349 = vunpack.c.h.b16 %v317
    %v350 = vunpack.c.l.b16 %v318
    %v351 = vunpack.c.h.b16 %v318
    %v352 = vunpack.c.l.b16 %v319
    %v353 = vunpack.c.h.b16 %v319
    %v354 = vunpack.c.l.b16 %v320
    %v355 = vunpack.c.h.b16 %v320
    %v356 = vunpack.c.l.b16 %v321
    %v357 = vunpack.c.h.b16 %v321
    %v358 = vunpack.c.l.b16 %v322
    %v359 = vunpack.c.h.b16 %v322
    %v360 = vpack.c.b16 %v346, %v344
    %v361 = vpack.c.b16 %v347, %v345
    %v362 = vpack.c.b16 %v350, %v348
    %v363 = vpack.c.b16 %v351, %v349
    %v364 = vpack.c.b16 %v354, %v352
    %v365 = vpack.c.b16 %v355, %v353
    %v366 = vpack.c.b16 %v358, %v356
    %v367 = vpack.c.b16 %v359, %v357
    %vm376 = vcmask 523264
    %v378 = vsel %vm376, %v335, 0
    %380 = vmatprep.subr.bf16.mxu0 %v361
    %381 = vmatpush1.bf16.msra.mxu0 %v360
    %382 = vmatprep.subr.bf16.mxu0 %v363
    %383 = vmatpush1.bf16.msra.mxu0 %v362
    %384 = vmatprep.subr.bf16.mxu0 %v365
    %385 = vmatpush1.bf16.msra.mxu0 %v364
    %386 = vmatprep.subr.bf16.mxu0 %v367
    %387 = vmatpush1.bf16.msra.mxu0 %v366
    %388 = vmatprep.subr.bf16.mxu0 0
    %389 = vmatpush1.bf16.msra.mxu0 0
    %390 = vmatprep.subr.bf16.mxu0 0
    %391 = vmatpush1.bf16.msra.mxu0 0
    %392 = vmatprep.subr.bf16.mxu0 0
    %393 = vmatpush1.bf16.msra.mxu0 0
    %394 = vmatprep.subr.bf16.mxu0 0
    %395 = vmatpush1.bf16.msra.mxu0 0
    %396 = vmatprep.subr.bf16.mxu0 0
    %397 = vmatpush1.bf16.msra.mxu0 0
    %398 = vmatprep.subr.bf16.mxu0 0
    %399 = vmatpush1.bf16.msra.mxu0 0
    %400 = vmatprep.subr.bf16.mxu0 0
    %401 = vmatpush1.bf16.msra.mxu0 0
    %402 = vmatprep.subr.bf16.mxu0 0
    %403 = vmatpush1.bf16.msra.mxu0 0
    %404 = vmatprep.subr.bf16.mxu0 0
    %405 = vmatpush1.bf16.msra.mxu0 0
    %406 = vmatprep.subr.bf16.mxu0 0
    %407 = vmatpush1.bf16.msra.mxu0 0
    %408 = vmatprep.subr.bf16.mxu0 0
    %409 = vmatpush1.bf16.msra.mxu0 0
    %410 = vmatprep.subr.bf16.mxu0 0
    %411 = vmatpush1.bf16.msra.mxu0 0
    %412 = vmatprep.mubr.bf16.mxu0 0
    %413 = vmatmul.mubr.bf16.gmra.mrb[0].mxu0 %v378
    %v414 = vpop.f32.mrb[0].mxu0
    %v415 = vadd.f32 0.0, %v414
    %v416 = vpop.f32.mrb[0].mxu0
    %v417 = vadd.f32 0.0, %v416
    %v418 = vpop.f32.mrb[0].mxu0
    %v419 = vpop.f32.mrb[0].mxu0
    %420 = vdwg.mxu0
    %v421 = vadd.f32 %v266, %v415
    %v422 = vadd.f32 %v268, %v417
    %v423 = vxor.u32 %v421, 2147483648
    %v424 = vxor.u32 %v422, 2147483648
    %v425 = vmul.f32 %v423, 1.442695
    %v426 = vpow.pop %v425
    %v427 = vmul.f32 %v424, 1.442695
    %v428 = vpow.pop %v427
    %v429 = vadd.f32 %v426, 1.0
    %v430 = vadd.f32 %v428, 1.0
    %v431 = vrcp.pop %v429
    %v432 = vmul.f32 1.0, %v431
    %v433 = vrcp.pop %v430
    %v434 = vmul.f32 1.0, %v433
    %v435 = vtanh.pop %v422
    %437 = vrot.lane.b32.xlu0 %v313, 64
    %v438 = vpop.permute.xlu0 %437
    %v440 = vmul.f32 %v432, %v438
    %442 = vrot.lane.b32.xlu0 %v435, 64
    %v443 = vpop.permute.xlu0 %442
    %v445 = vmul.f32 %v432, %v443
    %447 = vrot.lane.b32.xlu0 %v445, 64
    %v448 = vpop.permute.xlu0 %447
    %v450 = vadd.f32 %v440, %v448
    %v451 = vtanh.pop %v450
    %453 = vrot.lane.b32.xlu0 %v451, 64
    %v454 = vpop.permute.xlu0 %453
    %v456 = vmul.f32 %v434, %v454
    %v457 = vpack.c.bf16 %v456, %v456
    %v459 = vsel %vm376, %v457, 0
    %461 = vmatprep.subr.bf16.mxu0 %v361
    %462 = vmatpush1.bf16.msra.mxu0 %v360
    %463 = vmatprep.subr.bf16.mxu0 %v363
    %464 = vmatpush1.bf16.msra.mxu0 %v362
    %465 = vmatprep.subr.bf16.mxu0 %v365
    %466 = vmatpush1.bf16.msra.mxu0 %v364
    %467 = vmatprep.subr.bf16.mxu0 %v367
    %468 = vmatpush1.bf16.msra.mxu0 %v366
    %469 = vmatprep.subr.bf16.mxu0 0
    %470 = vmatpush1.bf16.msra.mxu0 0
    %471 = vmatprep.subr.bf16.mxu0 0
    %472 = vmatpush1.bf16.msra.mxu0 0
    %473 = vmatprep.subr.bf16.mxu0 0
    %474 = vmatpush1.bf16.msra.mxu0 0
    %475 = vmatprep.subr.bf16.mxu0 0
    %476 = vmatpush1.bf16.msra.mxu0 0
    %477 = vmatprep.subr.bf16.mxu0 0
    %478 = vmatpush1.bf16.msra.mxu0 0
    %479 = vmatprep.subr.bf16.mxu0 0
    %480 = vmatpush1.bf16.msra.mxu0 0
    %481 = vmatprep.subr.bf16.mxu0 0
    %482 = vmatpush1.bf16.msra.mxu0 0
    %483 = vmatprep.subr.bf16.mxu0 0
    %484 = vmatpush1.bf16.msra.mxu0 0
    %485 = vmatprep.subr.bf16.mxu0 0
    %486 = vmatpush1.bf16.msra.mxu0 0
    %487 = vmatprep.subr.bf16.mxu0 0
    %488 = vmatpush1.bf16.msra.mxu0 0
    %489 = vmatprep.subr.bf16.mxu0 0
    %490 = vmatpush1.bf16.msra.mxu0 0
    %491 = vmatprep.subr.bf16.mxu0 0
    %492 = vmatpush1.bf16.msra.mxu0 0
    %493 = vmatprep.mubr.bf16.mxu0 0
    %494 = vmatmul.mubr.bf16.gmra.mrb[0].mxu0 %v459
    %v495 = vpop.f32.mrb[0].mxu0
    %v496 = vadd.f32 0.0, %v495
    %v497 = vpop.f32.mrb[0].mxu0
    %v498 = vadd.f32 0.0, %v497
    %v499 = vpop.f32.mrb[0].mxu0
    %v500 = vpop.f32.mrb[0].mxu0
    %501 = vdwg.mxu0
    %v502 = vadd.f32 %v272, %v496
    %v503 = vadd.f32 %v274, %v498
    %v504 = vxor.u32 %v502, 2147483648
    %v505 = vxor.u32 %v503, 2147483648
    %v506 = vmul.f32 %v504, 1.442695
    %v507 = vpow.pop %v506
    %v508 = vmul.f32 %v505, 1.442695
    %v509 = vpow.pop %v508
    %v510 = vadd.f32 %v507, 1.0
    %v511 = vadd.f32 %v509, 1.0
    %v512 = vrcp.pop %v510
    %v513 = vmul.f32 1.0, %v512
    %v514 = vrcp.pop %v511
    %v515 = vmul.f32 1.0, %v514
    %v516 = vtanh.pop %v503
    %v517 = vmul.f32 %v513, %v450
    %519 = vrot.lane.b32.xlu0 %v516, 64
    %v520 = vpop.permute.xlu0 %519
    %v522 = vmul.f32 %v513, %v520
    %524 = vrot.lane.b32.xlu0 %v522, 64
    %v525 = vpop.permute.xlu0 %524
    %v527 = vadd.f32 %v517, %v525
    %v528 = vtanh.pop %v527
    %530 = vrot.lane.b32.xlu0 %v528, 64
    %v531 = vpop.permute.xlu0 %530
    %v533 = vmul.f32 %v515, %v531
    %v534 = vmax.f32 %v456, %v533
    %v535 = vpack.c.bf16 %v533, %v533
    %v537 = vsel %vm376, %v535, 0
    %539 = vmatprep.subr.bf16.mxu0 %v361
    %540 = vmatpush1.bf16.msra.mxu0 %v360
    %541 = vmatprep.subr.bf16.mxu0 %v363
    %542 = vmatpush1.bf16.msra.mxu0 %v362
    %543 = vmatprep.subr.bf16.mxu0 %v365
    %544 = vmatpush1.bf16.msra.mxu0 %v364
    %545 = vmatprep.subr.bf16.mxu0 %v367
    %546 = vmatpush1.bf16.msra.mxu0 %v366
    %547 = vmatprep.subr.bf16.mxu0 0
    %548 = vmatpush1.bf16.msra.mxu0 0
    %549 = vmatprep.subr.bf16.mxu0 0
    %550 = vmatpush1.bf16.msra.mxu0 0
    %551 = vmatprep.subr.bf16.mxu0 0
    %552 = vmatpush1.bf16.msra.mxu0 0
    %553 = vmatprep.subr.bf16.mxu0 0
    %554 = vmatpush1.bf16.msra.mxu0 0
    %555 = vmatprep.subr.bf16.mxu0 0
    %556 = vmatpush1.bf16.msra.mxu0 0
    %557 = vmatprep.subr.bf16.mxu0 0
    %558 = vmatpush1.bf16.msra.mxu0 0
    %559 = vmatprep.subr.bf16.mxu0 0
    %560 = vmatpush1.bf16.msra.mxu0 0
    %561 = vmatprep.subr.bf16.mxu0 0
    %562 = vmatpush1.bf16.msra.mxu0 0
    %563 = vmatprep.subr.bf16.mxu0 0
    %564 = vmatpush1.bf16.msra.mxu0 0
    %565 = vmatprep.subr.bf16.mxu0 0
    %566 = vmatpush1.bf16.msra.mxu0 0
    %567 = vmatprep.subr.bf16.mxu0 0
    %568 = vmatpush1.bf16.msra.mxu0 0
    %569 = vmatprep.subr.bf16.mxu0 0
    %570 = vmatpush1.bf16.msra.mxu0 0
    %571 = vmatprep.mubr.bf16.mxu0 0
    %572 = vmatmul.mubr.bf16.gmra.mrb[0].mxu0 %v537
    %v573 = vpop.f32.mrb[0].mxu0
    %v574 = vadd.f32 0.0, %v573
    %v575 = vpop.f32.mrb[0].mxu0
    %v576 = vadd.f32 0.0, %v575
    %v577 = vpop.f32.mrb[0].mxu0
    %v578 = vpop.f32.mrb[0].mxu0
    %579 = vdwg.mxu0
    %v580 = vadd.f32 %v278, %v574
    %v581 = vadd.f32 %v280, %v576
    %v582 = vxor.u32 %v580, 2147483648
    %v583 = vxor.u32 %v581, 2147483648
    %v584 = vmul.f32 %v582, 1.442695
    %v585 = vpow.pop %v584
    %v586 = vmul.f32 %v583, 1.442695
    %v587 = vpow.pop %v586
    %v588 = vadd.f32 %v585, 1.0
    %v589 = vadd.f32 %v587, 1.0
    %v590 = vrcp.pop %v588
    %v591 = vmul.f32 1.0, %v590
    %v592 = vrcp.pop %v589
    %v593 = vmul.f32 1.0, %v592
    %v594 = vtanh.pop %v581
    %v595 = vmul.f32 %v591, %v527
    %597 = vrot.lane.b32.xlu0 %v594, 64
    %v598 = vpop.permute.xlu0 %597
    %v600 = vmul.f32 %v591, %v598
    %602 = vrot.lane.b32.xlu0 %v600, 64
    %v603 = vpop.permute.xlu0 %602
    %v605 = vadd.f32 %v595, %v603
    %v606 = vtanh.pop %v605
    %608 = vrot.lane.b32.xlu0 %v606, 64
    %v609 = vpop.permute.xlu0 %608
    %v611 = vmul.f32 %v593, %v609
    %v612 = vmax.f32 %v534, %v611
    %v613 = vpack.c.bf16 %v611, %v611
    %v615 = vsel %vm376, %v613, 0
    %617 = vmatprep.subr.bf16.mxu0 %v361
    %618 = vmatpush1.bf16.msra.mxu0 %v360
    %619 = vmatprep.subr.bf16.mxu0 %v363
    %620 = vmatpush1.bf16.msra.mxu0 %v362
    %621 = vmatprep.subr.bf16.mxu0 %v365
    %622 = vmatpush1.bf16.msra.mxu0 %v364
    %623 = vmatprep.subr.bf16.mxu0 %v367
    %624 = vmatpush1.bf16.msra.mxu0 %v366
    %625 = vmatprep.subr.bf16.mxu0 0
    %626 = vmatpush1.bf16.msra.mxu0 0
    %627 = vmatprep.subr.bf16.mxu0 0
    %628 = vmatpush1.bf16.msra.mxu0 0
    %629 = vmatprep.subr.bf16.mxu0 0
    %630 = vmatpush1.bf16.msra.mxu0 0
    %631 = vmatprep.subr.bf16.mxu0 0
    %632 = vmatpush1.bf16.msra.mxu0 0
    %633 = vmatprep.subr.bf16.mxu0 0
    %634 = vmatpush1.bf16.msra.mxu0 0
    %635 = vmatprep.subr.bf16.mxu0 0
    %636 = vmatpush1.bf16.msra.mxu0 0
    %637 = vmatprep.subr.bf16.mxu0 0
    %638 = vmatpush1.bf16.msra.mxu0 0
    %639 = vmatprep.subr.bf16.mxu0 0
    %640 = vmatpush1.bf16.msra.mxu0 0
    %641 = vmatprep.subr.bf16.mxu0 0
    %642 = vmatpush1.bf16.msra.mxu0 0
    %643 = vmatprep.subr.bf16.mxu0 0
    %644 = vmatpush1.bf16.msra.mxu0 0
    %645 = vmatprep.subr.bf16.mxu0 0
    %646 = vmatpush1.bf16.msra.mxu0 0
    %647 = vmatprep.subr.bf16.mxu0 0
    %648 = vmatpush1.bf16.msra.mxu0 0
    %649 = vmatprep.mubr.bf16.mxu0 0
    %650 = vmatmul.mubr.bf16.gmra.mrb[0].mxu0 %v615
    %v651 = vpop.f32.mrb[0].mxu0
    %v652 = vadd.f32 0.0, %v651
    %v653 = vpop.f32.mrb[0].mxu0
    %v654 = vadd.f32 0.0, %v653
    %v655 = vpop.f32.mrb[0].mxu0
    %v656 = vpop.f32.mrb[0].mxu0
    %657 = vdwg.mxu0
    %v658 = vadd.f32 %v284, %v652
    %v659 = vadd.f32 %v286, %v654
    %v660 = vxor.u32 %v658, 2147483648
    %v661 = vxor.u32 %v659, 2147483648
    %v662 = vmul.f32 %v660, 1.442695
    %v663 = vpow.pop %v662
    %v664 = vmul.f32 %v661, 1.442695
    %v665 = vpow.pop %v664
    %v666 = vadd.f32 %v663, 1.0
    %v667 = vadd.f32 %v665, 1.0
    %v668 = vrcp.pop %v666
    %v669 = vmul.f32 1.0, %v668
    %v670 = vrcp.pop %v667
    %v671 = vmul.f32 1.0, %v670
    %v672 = vtanh.pop %v659
    %v673 = vmul.f32 %v669, %v605
    %675 = vrot.lane.b32.xlu0 %v672, 64
    %v676 = vpop.permute.xlu0 %675
    %v678 = vmul.f32 %v669, %v676
    %680 = vrot.lane.b32.xlu0 %v678, 64
    %v681 = vpop.permute.xlu0 %680
    %v683 = vadd.f32 %v673, %v681
    %v684 = vtanh.pop %v683
    %686 = vrot.lane.b32.xlu0 %v684, 64
    %v687 = vpop.permute.xlu0 %686
    %v689 = vmul.f32 %v671, %v687
    %v690 = vmax.f32 %v612, %v689
    %v691 = vpack.c.bf16 %v689, %v689
    %v693 = vsel %vm376, %v691, 0
    %695 = vmatprep.subr.bf16.mxu0 %v361
    %696 = vmatpush1.bf16.msra.mxu0 %v360
    %697 = vmatprep.subr.bf16.mxu0 %v363
    %698 = vmatpush1.bf16.msra.mxu0 %v362
    %699 = vmatprep.subr.bf16.mxu0 %v365
    %700 = vmatpush1.bf16.msra.mxu0 %v364
    %701 = vmatprep.subr.bf16.mxu0 %v367
    %702 = vmatpush1.bf16.msra.mxu0 %v366
    %703 = vmatprep.subr.bf16.mxu0 0
    %704 = vmatpush1.bf16.msra.mxu0 0
    %705 = vmatprep.subr.bf16.mxu0 0
    %706 = vmatpush1.bf16.msra.mxu0 0
    %707 = vmatprep.subr.bf16.mxu0 0
    %708 = vmatpush1.bf16.msra.mxu0 0
    %709 = vmatprep.subr.bf16.mxu0 0
    %710 = vmatpush1.bf16.msra.mxu0 0
    %711 = vmatprep.subr.bf16.mxu0 0
    %712 = vmatpush1.bf16.msra.mxu0 0
    %713 = vmatprep.subr.bf16.mxu0 0
    %714 = vmatpush1.bf16.msra.mxu0 0
    %715 = vmatprep.subr.bf16.mxu0 0
    %716 = vmatpush1.bf16.msra.mxu0 0
    %717 = vmatprep.subr.bf16.mxu0 0
    %718 = vmatpush1.bf16.msra.mxu0 0
    %719 = vmatprep.subr.bf16.mxu0 0
    %720 = vmatpush1.bf16.msra.mxu0 0
    %721 = vmatprep.subr.bf16.mxu0 0
    %722 = vmatpush1.bf16.msra.mxu0 0
    %723 = vmatprep.subr.bf16.mxu0 0
    %724 = vmatpush1.bf16.msra.mxu0 0
    %725 = vmatprep.subr.bf16.mxu0 0
    %726 = vmatpush1.bf16.msra.mxu0 0
    %727 = vmatprep.mubr.bf16.mxu0 0
    %728 = vmatmul.mubr.bf16.gmra.mrb[0].mxu0 %v693
    %v729 = vpop.f32.mrb[0].mxu0
    %v730 = vadd.f32 0.0, %v729
    %v731 = vpop.f32.mrb[0].mxu0
    %v732 = vadd.f32 0.0, %v731
    %v733 = vpop.f32.mrb[0].mxu0
    %v734 = vpop.f32.mrb[0].mxu0
    %735 = vdwg.mxu0
    %v736 = vadd.f32 %v290, %v730
    %v737 = vadd.f32 %v292, %v732
    %v738 = vxor.u32 %v736, 2147483648
    %v739 = vxor.u32 %v737, 2147483648
    %v740 = vmul.f32 %v738, 1.442695
    %v741 = vpow.pop %v740
    %v742 = vmul.f32 %v739, 1.442695
    %v743 = vpow.pop %v742
    %v744 = vadd.f32 %v741, 1.0
    %v745 = vadd.f32 %v743, 1.0
    %v746 = vrcp.pop %v744
    %v747 = vmul.f32 1.0, %v746
    %v748 = vrcp.pop %v745
    %v749 = vmul.f32 1.0, %v748
    %v750 = vtanh.pop %v737
    %v751 = vmul.f32 %v747, %v683
    %753 = vrot.lane.b32.xlu0 %v750, 64
    %v754 = vpop.permute.xlu0 %753
    %v756 = vmul.f32 %v747, %v754
    %758 = vrot.lane.b32.xlu0 %v756, 64
    %v759 = vpop.permute.xlu0 %758
    %v761 = vadd.f32 %v751, %v759
    %v762 = vtanh.pop %v761
    %764 = vrot.lane.b32.xlu0 %v762, 64
    %v765 = vpop.permute.xlu0 %764
    %v767 = vmul.f32 %v749, %v765
    %v768 = vmax.f32 %v690, %v767
    %v769 = vpack.c.bf16 %v767, %v767
    %v771 = vsel %vm376, %v769, 0
    %773 = vmatprep.subr.bf16.mxu0 %v361
    %774 = vmatpush1.bf16.msra.mxu0 %v360
    %775 = vmatprep.subr.bf16.mxu0 %v363
    %776 = vmatpush1.bf16.msra.mxu0 %v362
    %777 = vmatprep.subr.bf16.mxu0 %v365
    %778 = vmatpush1.bf16.msra.mxu0 %v364
    %779 = vmatprep.subr.bf16.mxu0 %v367
    %780 = vmatpush1.bf16.msra.mxu0 %v366
    %781 = vmatprep.subr.bf16.mxu0 0
    %782 = vmatpush1.bf16.msra.mxu0 0
    %783 = vmatprep.subr.bf16.mxu0 0
    %784 = vmatpush1.bf16.msra.mxu0 0
    %785 = vmatprep.subr.bf16.mxu0 0
    %786 = vmatpush1.bf16.msra.mxu0 0
    %787 = vmatprep.subr.bf16.mxu0 0
    %788 = vmatpush1.bf16.msra.mxu0 0
    %789 = vmatprep.subr.bf16.mxu0 0
    %790 = vmatpush1.bf16.msra.mxu0 0
    %791 = vmatprep.subr.bf16.mxu0 0
    %792 = vmatpush1.bf16.msra.mxu0 0
    %793 = vmatprep.subr.bf16.mxu0 0
    %794 = vmatpush1.bf16.msra.mxu0 0
    %795 = vmatprep.subr.bf16.mxu0 0
    %796 = vmatpush1.bf16.msra.mxu0 0
    %797 = vmatprep.subr.bf16.mxu0 0
    %798 = vmatpush1.bf16.msra.mxu0 0
    %799 = vmatprep.subr.bf16.mxu0 0
    %800 = vmatpush1.bf16.msra.mxu0 0
    %801 = vmatprep.subr.bf16.mxu0 0
    %802 = vmatpush1.bf16.msra.mxu0 0
    %803 = vmatprep.subr.bf16.mxu0 0
    %804 = vmatpush1.bf16.msra.mxu0 0
    %805 = vmatprep.mubr.bf16.mxu0 0
    %806 = vmatmul.mubr.bf16.gmra.mrb[0].mxu0 %v771
    %v807 = vpop.f32.mrb[0].mxu0
    %v808 = vadd.f32 0.0, %v807
    %v809 = vpop.f32.mrb[0].mxu0
    %v810 = vadd.f32 0.0, %v809
    %v811 = vpop.f32.mrb[0].mxu0
    %v812 = vpop.f32.mrb[0].mxu0
    %813 = vdwg.mxu0
    %v814 = vadd.f32 %v296, %v808
    %v815 = vadd.f32 %v298, %v810
    %v816 = vxor.u32 %v814, 2147483648
    %v817 = vxor.u32 %v815, 2147483648
    %v818 = vmul.f32 %v816, 1.442695
    %v819 = vpow.pop %v818
    %v820 = vmul.f32 %v817, 1.442695
    %v821 = vpow.pop %v820
    %v822 = vadd.f32 %v819, 1.0
    %v823 = vadd.f32 %v821, 1.0
    %v824 = vrcp.pop %v822
    %v825 = vmul.f32 1.0, %v824
    %v826 = vrcp.pop %v823
    %v827 = vmul.f32 1.0, %v826
    %v828 = vtanh.pop %v815
    %v829 = vmul.f32 %v825, %v761
    %831 = vrot.lane.b32.xlu0 %v828, 64
    %v832 = vpop.permute.xlu0 %831
    %v834 = vmul.f32 %v825, %v832
    %836 = vrot.lane.b32.xlu0 %v834, 64
    %v837 = vpop.permute.xlu0 %836
    %v839 = vadd.f32 %v829, %v837
    %v840 = vtanh.pop %v839
    %842 = vrot.lane.b32.xlu0 %v840, 64
    %v843 = vpop.permute.xlu0 %842
    %v845 = vmul.f32 %v827, %v843
    %v846 = vmax.f32 %v768, %v845
    %v847 = vpack.c.bf16 %v845, %v845
    %v849 = vsel %vm376, %v847, 0
    %851 = vmatprep.subr.bf16.mxu0 %v361
    %852 = vmatpush1.bf16.msra.mxu0 %v360
    %853 = vmatprep.subr.bf16.mxu0 %v363
    %854 = vmatpush1.bf16.msra.mxu0 %v362
    %855 = vmatprep.subr.bf16.mxu0 %v365
    %856 = vmatpush1.bf16.msra.mxu0 %v364
    %857 = vmatprep.subr.bf16.mxu0 %v367
    %858 = vmatpush1.bf16.msra.mxu0 %v366
    %859 = vmatprep.subr.bf16.mxu0 0
    %860 = vmatpush1.bf16.msra.mxu0 0
    %861 = vmatprep.subr.bf16.mxu0 0
    %862 = vmatpush1.bf16.msra.mxu0 0
    %863 = vmatprep.subr.bf16.mxu0 0
    %864 = vmatpush1.bf16.msra.mxu0 0
    %865 = vmatprep.subr.bf16.mxu0 0
    %866 = vmatpush1.bf16.msra.mxu0 0
    %867 = vmatprep.subr.bf16.mxu0 0
    %868 = vmatpush1.bf16.msra.mxu0 0
    %869 = vmatprep.subr.bf16.mxu0 0
    %870 = vmatpush1.bf16.msra.mxu0 0
    %871 = vmatprep.subr.bf16.mxu0 0
    %872 = vmatpush1.bf16.msra.mxu0 0
    %873 = vmatprep.subr.bf16.mxu0 0
    %874 = vmatpush1.bf16.msra.mxu0 0
    %875 = vmatprep.subr.bf16.mxu0 0
    %876 = vmatpush1.bf16.msra.mxu0 0
    %877 = vmatprep.subr.bf16.mxu0 0
    %878 = vmatpush1.bf16.msra.mxu0 0
    %879 = vmatprep.subr.bf16.mxu0 0
    %880 = vmatpush1.bf16.msra.mxu0 0
    %881 = vmatprep.subr.bf16.mxu0 0
    %882 = vmatpush1.bf16.msra.mxu0 0
    %883 = vmatprep.mubr.bf16.mxu0 0
    %884 = vmatmul.mubr.bf16.gmra.mrb[0].mxu0 %v849
    %v885 = vpop.f32.mrb[0].mxu0
    %v886 = vadd.f32 0.0, %v885
    %v887 = vpop.f32.mrb[0].mxu0
    %v888 = vadd.f32 0.0, %v887
    %v889 = vpop.f32.mrb[0].mxu0
    %v890 = vpop.f32.mrb[0].mxu0
    %891 = vdwg.mxu0
    %v892 = vadd.f32 %v302, %v886
    %v893 = vadd.f32 %v304, %v888
    %v894 = vxor.u32 %v892, 2147483648
    %v895 = vxor.u32 %v893, 2147483648
    %v896 = vmul.f32 %v894, 1.442695
    %v897 = vpow.pop %v896
    %v898 = vmul.f32 %v895, 1.442695
    %v899 = vpow.pop %v898
    %v900 = vadd.f32 %v897, 1.0
    %v901 = vadd.f32 %v899, 1.0
    %v902 = vrcp.pop %v900
    %v903 = vmul.f32 1.0, %v902
    %v904 = vrcp.pop %v901
    %v905 = vmul.f32 1.0, %v904
    %v906 = vtanh.pop %v893
    %v907 = vmul.f32 %v903, %v839
    %909 = vrot.lane.b32.xlu0 %v906, 64
    %v910 = vpop.permute.xlu0 %909
    %v912 = vmul.f32 %v903, %v910
    %914 = vrot.lane.b32.xlu0 %v912, 64
    %v915 = vpop.permute.xlu0 %914
    %v917 = vadd.f32 %v907, %v915
    %v918 = vtanh.pop %v917
    %920 = vrot.lane.b32.xlu0 %v918, 64
    %v921 = vpop.permute.xlu0 %920
    %v923 = vmul.f32 %v905, %v921
    %v924 = vmax.f32 %v846, %v923
    %v925 = vpack.c.bf16 %v923, %v923
    %v927 = vsel %vm376, %v925, 0
    %929 = vmatprep.subr.bf16.mxu0 %v361
    %930 = vmatpush1.bf16.msra.mxu0 %v360
    %931 = vmatprep.subr.bf16.mxu0 %v363
    %932 = vmatpush1.bf16.msra.mxu0 %v362
    %933 = vmatprep.subr.bf16.mxu0 %v365
    %934 = vmatpush1.bf16.msra.mxu0 %v364
    %935 = vmatprep.subr.bf16.mxu0 %v367
    %936 = vmatpush1.bf16.msra.mxu0 %v366
    %937 = vmatprep.subr.bf16.mxu0 0
    %938 = vmatpush1.bf16.msra.mxu0 0
    %939 = vmatprep.subr.bf16.mxu0 0
    %940 = vmatpush1.bf16.msra.mxu0 0
    %941 = vmatprep.subr.bf16.mxu0 0
    %942 = vmatpush1.bf16.msra.mxu0 0
    %943 = vmatprep.subr.bf16.mxu0 0
    %944 = vmatpush1.bf16.msra.mxu0 0
    %945 = vmatprep.subr.bf16.mxu0 0
    %946 = vmatpush1.bf16.msra.mxu0 0
    %947 = vmatprep.subr.bf16.mxu0 0
    %948 = vmatpush1.bf16.msra.mxu0 0
    %949 = vmatprep.subr.bf16.mxu0 0
    %950 = vmatpush1.bf16.msra.mxu0 0
    %951 = vmatprep.subr.bf16.mxu0 0
    %952 = vmatpush1.bf16.msra.mxu0 0
    %953 = vmatprep.subr.bf16.mxu0 0
    %954 = vmatpush1.bf16.msra.mxu0 0
    %955 = vmatprep.subr.bf16.mxu0 0
    %956 = vmatpush1.bf16.msra.mxu0 0
    %957 = vmatprep.subr.bf16.mxu0 0
    %958 = vmatpush1.bf16.msra.mxu0 0
    %959 = vmatprep.subr.bf16.mxu0 0
    %960 = vmatpush1.bf16.msra.mxu0 0
    %961 = vmatprep.mubr.bf16.mxu0 0
    %962 = vmatmul.mubr.bf16.gmra.mrb[0].mxu0 %v927
    %v963 = vpop.f32.mrb[0].mxu0
    %v964 = vadd.f32 0.0, %v963
    %v965 = vpop.f32.mrb[0].mxu0
    %v966 = vadd.f32 0.0, %v965
    %v967 = vpop.f32.mrb[0].mxu0
    %v968 = vpop.f32.mrb[0].mxu0
    %969 = vdwg.mxu0
    %v970 = vadd.f32 %v308, %v964
    %v971 = vadd.f32 %v310, %v966
    %v972 = vxor.u32 %v970, 2147483648
    %v973 = vxor.u32 %v971, 2147483648
    %v974 = vmul.f32 %v972, 1.442695
    %v975 = vpow.pop %v974
    %v976 = vmul.f32 %v973, 1.442695
    %v977 = vpow.pop %v976
    %v978 = vadd.f32 %v975, 1.0
    %v979 = vadd.f32 %v977, 1.0
    %v980 = vrcp.pop %v978
    %v981 = vmul.f32 1.0, %v980
    %v982 = vrcp.pop %v979
    %v983 = vmul.f32 1.0, %v982
    %v984 = vtanh.pop %v971
    %v985 = vmul.f32 %v981, %v917
    %987 = vrot.lane.b32.xlu0 %v984, 64
    %v988 = vpop.permute.xlu0 %987
    %v990 = vmul.f32 %v981, %v988
    %992 = vrot.lane.b32.xlu0 %v990, 64
    %v993 = vpop.permute.xlu0 %992
    %v995 = vadd.f32 %v985, %v993
    %v996 = vtanh.pop %v995
    %998 = vrot.lane.b32.xlu0 %v996, 64
    %v999 = vpop.permute.xlu0 %998
    %v1001 = vmul.f32 %v983, %v999
    %v1002 = vmax.f32 %v924, %v1001
    %v1003 = vtanh.pop %v1002
    %v1004 = vpack.c.bf16 %v1003, %v1003
    %v1005 = vlaneseq
    %v1006 = vshrl.u32 %v1005, 7
    %v1007 = vsub.s32 0, %v1006
    %v1008 = vrot.slane %v314, %v1007
    %v1017 = vunpack.c.l.b16 %v323
    %v1018 = vunpack.c.l.b16 %v324
    %v1019 = vunpack.c.l.b16 %v325
    %v1020 = vunpack.c.l.b16 %v326
    %v1021 = vunpack.c.l.b16 %v327
    %v1022 = vunpack.c.l.b16 %v328
    %v1023 = vunpack.c.l.b16 %v329
    %v1024 = vunpack.c.l.b16 %v330
    %v1025 = vpack.c.b16 %v1018, %v1017
    %v1026 = vpack.c.b16 %v1020, %v1019
    %v1027 = vpack.c.b16 %v1022, %v1021
    %v1028 = vpack.c.b16 %v1024, %v1023
    %v1034 = vsel %vm376, %v1004, 0
    %1036 = vmatprep.subr.bf16.mxu0 0
    %1037 = vmatpush1.bf16.msra.mxu0 %v1025
    %1038 = vmatprep.subr.bf16.mxu0 0
    %1039 = vmatpush1.bf16.msra.mxu0 %v1026
    %1040 = vmatprep.subr.bf16.mxu0 0
    %1041 = vmatpush1.bf16.msra.mxu0 %v1027
    %1042 = vmatprep.subr.bf16.mxu0 0
    %1043 = vmatpush1.bf16.msra.mxu0 %v1028
    %1044 = vmatprep.subr.bf16.mxu0 0
    %1045 = vmatpush1.bf16.msra.mxu0 0
    %1046 = vmatprep.subr.bf16.mxu0 0
    %1047 = vmatpush1.bf16.msra.mxu0 0
    %1048 = vmatprep.subr.bf16.mxu0 0
    %1049 = vmatpush1.bf16.msra.mxu0 0
    %1050 = vmatprep.subr.bf16.mxu0 0
    %1051 = vmatpush1.bf16.msra.mxu0 0
    %1052 = vmatprep.subr.bf16.mxu0 0
    %1053 = vmatpush1.bf16.msra.mxu0 0
    %1054 = vmatprep.subr.bf16.mxu0 0
    %1055 = vmatpush1.bf16.msra.mxu0 0
    %1056 = vmatprep.subr.bf16.mxu0 0
    %1057 = vmatpush1.bf16.msra.mxu0 0
    %1058 = vmatprep.subr.bf16.mxu0 0
    %1059 = vmatpush1.bf16.msra.mxu0 0
    %1060 = vmatprep.subr.bf16.mxu0 0
    %1061 = vmatpush1.bf16.msra.mxu0 0
    %1062 = vmatprep.subr.bf16.mxu0 0
    %1063 = vmatpush1.bf16.msra.mxu0 0
    %1064 = vmatprep.subr.bf16.mxu0 0
    %1065 = vmatpush1.bf16.msra.mxu0 0
    %1066 = vmatprep.subr.bf16.mxu0 0
    %1067 = vmatpush1.bf16.msra.mxu0 0
    %1068 = vmatprep.mubr.bf16.mxu0 0
    %1069 = vmatmul.mubr.bf16.gmra.mrb[0].mxu0 %v1034
    %v1070 = vpop.f32.mrb[0].mxu0
    %v1071 = vadd.f32 %v1008, %v1070
    %v1072 = vpop.f32.mrb[0].mxu0
    %v1073 = vpop.f32.mrb[0].mxu0
    %v1074 = vpop.f32.mrb[0].mxu0
    %1075 = vdwg.mxu0
    %v1076 = vtanh.pop %v1071
    %v1077 = vpack.c.bf16 %v1076, %v1076
    %v1078 = vlaneseq
    %v1079 = vshrl.u32 %v1078, 7
    %v1080 = vsub.s32 1, %v1079
    %v1081 = vrot.slane %v314, %v1080
    %v1086 = vunpack.c.l.b16 %v331
    %v1087 = vunpack.c.l.b16 %v332
    %v1088 = vunpack.c.l.b16 %v333
    %v1089 = vunpack.c.l.b16 %v334
    %v1090 = vpack.c.b16 %v1087, %v1086
    %v1091 = vpack.c.b16 %v1089, %v1088
    %vm1094 = vcmask 261120
    %v1096 = vsel %vm1094, %v1077, 0
    %1098 = vmatprep.subr.bf16.mxu0 0
    %1099 = vmatpush1.bf16.msra.mxu0 %v1090
    %1100 = vmatprep.subr.bf16.mxu0 0
    %1101 = vmatpush1.bf16.msra.mxu0 %v1091
    %1102 = vmatprep.subr.bf16.mxu0 0
    %1103 = vmatpush1.bf16.msra.mxu0 0
    %1104 = vmatprep.subr.bf16.mxu0 0
    %1105 = vmatpush1.bf16.msra.mxu0 0
    %1106 = vmatprep.subr.bf16.mxu0 0
    %1107 = vmatpush1.bf16.msra.mxu0 0
    %1108 = vmatprep.subr.bf16.mxu0 0
    %1109 = vmatpush1.bf16.msra.mxu0 0
    %1110 = vmatprep.subr.bf16.mxu0 0
    %1111 = vmatpush1.bf16.msra.mxu0 0
    %1112 = vmatprep.subr.bf16.mxu0 0
    %1113 = vmatpush1.bf16.msra.mxu0 0
    %1114 = vmatprep.subr.bf16.mxu0 0
    %1115 = vmatpush1.bf16.msra.mxu0 0
    %1116 = vmatprep.subr.bf16.mxu0 0
    %1117 = vmatpush1.bf16.msra.mxu0 0
    %1118 = vmatprep.subr.bf16.mxu0 0
    %1119 = vmatpush1.bf16.msra.mxu0 0
    %1120 = vmatprep.subr.bf16.mxu0 0
    %1121 = vmatpush1.bf16.msra.mxu0 0
    %1122 = vmatprep.subr.bf16.mxu0 0
    %1123 = vmatpush1.bf16.msra.mxu0 0
    %1124 = vmatprep.subr.bf16.mxu0 0
    %1125 = vmatpush1.bf16.msra.mxu0 0
    %1126 = vmatprep.subr.bf16.mxu0 0
    %1127 = vmatpush1.bf16.msra.mxu0 0
    %1128 = vmatprep.subr.bf16.mxu0 0
    %1129 = vmatpush1.bf16.msra.mxu0 0
    %1130 = vmatprep.mubr.bf16.mxu0 0
    %1131 = vmatmul.mubr.bf16.gmra.mrb[0].mxu0 %v1096
    %v1132 = vpop.f32.mrb[0].mxu0
    %v1133 = vadd.f32 %v1081, %v1132
    %v1134 = vpop.f32.mrb[0].mxu0
    %v1135 = vpop.f32.mrb[0].mxu0
    %v1136 = vpop.f32.mrb[0].mxu0
    %1137 = vdwg.mxu0
    %1138 = vst [vmem:[%s3] sm:$0xff] %v1133
    // Predicated region
    $region18: #{bilstm_forward.1} parent=1 // pred_check
      _
    $region19: #{bilstm_forward.1} parent=1 // pred_check_branch
      %1140 = sbr.rel (0) target = $region21
    $region20: #{bilstm_forward.1} parent=1 // pred_region
      _
    $region21: #{bilstm_forward.1} parent=1 // pred_fallthru
      _
    // Predicated region
    $region22: #{bilstm_forward.1} parent=1 // pred_check
      _
    $region23: #{bilstm_forward.1} parent=1 // pred_check_branch
      %1142 = sbr.rel (0) target = $region25
    $region24: #{bilstm_forward.1} parent=1 // pred_region
      _
    $region25: #{bilstm_forward.1} parent=1 // pred_fallthru
      _
    %1143 = vsyncpa [#allocation3], 1

</llo_original>
